<compile_context>
chip_gen: v5e
topology: v5e:2x2
jax: 0.10.0
libtpu: 0.0.40
codegen_flags: <defaults>
</compile_context>

<pallas_src>
import functools

import jax
import jax.numpy as jnp
from jax.experimental import pallas as pl
from jax.experimental.pallas import tpu as pltpu


def _num_tensorcores_per_chip():
    """Best-effort TensorCore count (v7x has 2 per chip; v5e/v6e have 1)."""
    try:
        info = pltpu.get_tpu_info()
        for attr in ("num_cores", "num_tensorcores", "tensorcore_count"):
            v = getattr(info, attr, None)
            if isinstance(v, int) and v > 0:
                return v
    except Exception:
        pass
    try:
        if "v7" in jax.devices()[0].device_kind.lower():
            return 2
    except Exception:
        pass
    return 1


_NUM_TC = _num_tensorcores_per_chip()
_MIN_TC_TILE = 256                    # don't shrink MXU M-dim below this for megacore
_VMEM_BUDGET = 28 * 1024 * 1024       # conservative; fits v7x 64 MiB phys & v5e/v6e
_VMEM_LIMIT = 32 * 1024 * 1024        # raise v5e's 16 MiB scoped default


def _round_up(v, m):
    return ((v + m - 1) // m) * m


def _vmem_estimate(bb, d, h, n_xbuf=3):
    x_bytes = n_xbuf * bb * d * 4      # f32 x tiles, multi-buffered
    w1_bytes = 2 * d * h * 2           # bf16 W1, double-buffered (resident)
    h_bytes = bb * h * 4               # f32 intermediate h
    misc = 4 * h * 4 + 4 * bb * 4 + (1 << 16)
    return x_bytes + w1_bytes + h_bytes + misc


def mlp_kernel(x_ref, w1_ref, b1_ref, w2_ref, b2_ref, o_ref):
    # x arrives in its HBM dtype; cast to bf16 for the MXU here (VPU work,
    # hidden under the x DMA / MXU), not as a separate XLA pass over HBM.
    xv = x_ref[...]
    if xv.dtype != jnp.bfloat16:
        xv = xv.astype(jnp.bfloat16)
    # Layer 1 (D -> 320) on the MXU with f32 accumulation.
    h = jnp.dot(xv, w1_ref[...], preferred_element_type=jnp.float32)
    # Bias + ReLU on the VPU in f32 (v5e has no bf16 VPU).
    h = jnp.maximum(h + b1_ref[...], 0.0)
    # Layer 2 (320 -> 1): elementwise multiply (VPU) + lane reduction (XLU)
    # instead of a 1-column MXU pass.
    y = jnp.sum(h * w2_ref[...], axis=-1, keepdims=True) + b2_ref[0, 0]
    # Exact sigmoid: exp on the EUP, exact divide (tighter than approx recip).
    o_ref[...] = (1.0 / (1.0 + jnp.exp(-y))).astype(o_ref.dtype)


@functools.partial(jax.jit, static_argnames=("block_b",))
def linear_prototype_fwd(x, w1, b1, w2, b2, *, block_b=4096):
    B, D = x.shape
    H = w1.shape[1]          # 320
    O = w2.shape[1]          # 1
    out_dtype = x.dtype

    # ---- batch tile: largest sublane-aligned tile that fits the VMEM budget --
    bb = max(8, min(_round_up(block_b, 8), _round_up(B, 8)))
    while bb > 8 and _vmem_estimate(bb, D, H) > _VMEM_BUDGET:
        bb = max(8, _round_up(bb // 2, 8))
    # TODO(synk): for very large D (>~16k) add a K-tiled path (3rd 'arbitrary'
    # grid axis + f32 acc scratch + pl.when init/finalize) instead of only
    # shrinking bb; also pad D to a multiple of 128 offline for peak v5e MXU.

    # ---- megacore split only on multi-TensorCore chips (v7x) -----------------
    if _NUM_TC >= 2 and B >= 2 * _MIN_TC_TILE:
        n_blocks = pl.cdiv(B, bb)
        if n_blocks < 2 * _NUM_TC and n_blocks % _NUM_TC != 0:
            target = _round_up(max(n_blocks, _NUM_TC), _NUM_TC)
            bb = max(_MIN_TC_TILE, _round_up(pl.cdiv(B, target), 8))

    n_blocks = pl.cdiv(B, bb)

    # x stream: triple-buffer when the grid is long enough to benefit.
    if n_blocks >= 3:
        x_spec = pl.BlockSpec((bb, D), lambda i: (i, 0),
                              pipeline_mode=pl.Buffered(3))
    else:
        x_spec = pl.BlockSpec((bb, D), lambda i: (i, 0))

    # Weight prep: tiny one-time casts/reshapes (D*320 elems), NOT the x stream.
    w1b = w1.astype(jnp.bfloat16)
    b1r = b1.reshape(1, H).astype(jnp.float32)
    w2r = w2.reshape(1, H).astype(jnp.float32)   # row layout for the VPU reduce
    b2s = b2.reshape(1, 1).astype(jnp.float32)   # scalar -> SMEM

    cost = pl.CostEstimate(
        flops=2 * B * D * H + 2 * B * H,
        transcendentals=B,
        bytes_accessed=B * D * x.dtype.itemsize + D * H * 2 + 2 * H * 4 + B * O * 4,
    )

    out = pl.pallas_call(
        mlp_kernel,
        out_shape=jax.ShapeDtypeStruct((B, O), out_dtype),
        grid_spec=pltpu.PrefetchScalarGridSpec(
            num_scalar_prefetch=0,
            grid=(n_blocks,),
            in_specs=[
                x_spec,                                          # x tile (streams)
                pl.BlockSpec((D, H), lambda i: (0, 0)),          # W1 (resident)
                pl.BlockSpec((1, H), lambda i: (0, 0)),          # b1
                pl.BlockSpec((1, H), lambda i: (0, 0)),          # w2 as a row
                pl.BlockSpec(memory_space=pltpu.MemorySpace.SMEM),  # b2 scalar
            ],
            out_specs=pl.BlockSpec((bb, O), lambda i: (i, 0)),
        ),
        compiler_params=pltpu.CompilerParams(
            dimension_semantics=("parallel",),
            vmem_limit_bytes=_VMEM_LIMIT,
        ),
        cost_estimate=cost,
    )(x, w1b, b1r, w2r, b2s)
    return out


def init_params(key, img_h, img_w):
    """Deterministic init mimicking nn.Linear defaults (uniform +-1/sqrt(fan_in))."""
    longshape = img_h * img_w
    k1, k2, k3, k4 = jax.random.split(key, 4)
    bound1 = 1.0 / jnp.sqrt(longshape)
    bound2 = 1.0 / jnp.sqrt(320.0)
    # stored as (in_features, out_features) so kernel does x @ W
    w1 = jax.random.uniform(k1, (longshape, 320), jnp.float32, -bound1, bound1)
    b1 = jax.random.uniform(k2, (1, 320), jnp.float32, -bound1, bound1)
    w2 = jax.random.uniform(k3, (320, 1), jnp.float32, -bound2, bound2)
    b2 = jax.random.uniform(k4, (1, 1), jnp.float32, -bound2, bound2)
    return w1, b1, w2, b2


if __name__ == "__main__":
    img_h, img_w = 16, 16        # longshape = 256
    batch = 256

    key = jax.random.PRNGKey(0)
    kx, kp = jax.random.split(key)
    x = jax.random.normal(kx, (batch, img_h * img_w), jnp.float32)
    w1, b1, w2, b2 = init_params(kp, img_h, img_w)

    out = linear_prototype_fwd(x, w1, b1, w2, b2)
    out = jax.block_until_ready(out)

    # correctness vs plain JAX f32 reference (bf16 MXU operands -> loose tol)
    ref = jax.nn.sigmoid(jnp.maximum(x @ w1 + b1, 0.0) @ w2 + b2)
    assert out.shape == (batch, 1)
    assert jnp.allclose(out, ref, atol=2e-2, rtol=2e-2), \
        float(jnp.max(jnp.abs(out - ref)))

    print("KERNEL_OK")
</pallas_src>

<mosaic_0001>
module attributes {stable_mosaic.version = 11 : i64} {
  func.func @mlp_kernel(%arg0: i32, %arg1: memref<256x256xf32, #tpu.memory_space<vmem>>, %arg2: memref<256x320xbf16, #tpu.memory_space<vmem>>, %arg3: memref<1x320xf32, #tpu.memory_space<vmem>>, %arg4: memref<1x320xf32, #tpu.memory_space<vmem>>, %arg5: memref<1x1xf32, #tpu.memory_space<smem>>, %arg6: memref<256x1xf32, #tpu.memory_space<vmem>>) attributes {dimension_semantics = [#tpu.dimension_semantics<parallel>], iteration_bounds = array<i64: 1>, scalar_prefetch = 0 : i64, scratch_operands = 0 : i64, tpu.core_type = #tpu.core_type<tc>, window_params = [{transform_indices = @transform_0, window_bounds = array<i64: 256, 256>}, {pipeline_mode = #tpu.pipeline_mode<synchronous>, transform_indices = @transform_1, window_bounds = array<i64: 256, 320>}, {pipeline_mode = #tpu.pipeline_mode<synchronous>, transform_indices = @transform_2, window_bounds = array<i64: 1, 320>}, {pipeline_mode = #tpu.pipeline_mode<synchronous>, transform_indices = @transform_3, window_bounds = array<i64: 1, 320>}, {transform_indices = @transform_4, window_bounds = array<i64: 1, 1>}, {transform_indices = @transform_5, window_bounds = array<i64: 256, 1>}]} {
    %c0 = arith.constant 0 : index
    %c0_0 = arith.constant 0 : index
    %0 = vector.load %arg1[%c0, %c0_0] : memref<256x256xf32, #tpu.memory_space<vmem>>, vector<256x256xf32>
    %1 = arith.truncf %0 : vector<256x256xf32> to vector<256x256xbf16>
    %c0_1 = arith.constant 0 : index
    %c0_2 = arith.constant 0 : index
    %2 = vector.load %arg2[%c0_1, %c0_2] : memref<256x320xbf16, #tpu.memory_space<vmem>>, vector<256x320xbf16>
    %cst = arith.constant dense<0.000000e+00> : vector<256x320xf32>
    %3 = tpu.matmul %1, %2, %cst {dimension_numbers = #tpu.dot_dimension_numbers<[1], [0], [0], [1], [0, 0, 1, 1], [], []>} : vector<256x256xbf16>, vector<256x320xbf16>, vector<256x320xf32> -> vector<256x320xf32>
    %c0_3 = arith.constant 0 : index
    %c0_4 = arith.constant 0 : index
    %4 = vector.load %arg3[%c0_3, %c0_4] : memref<1x320xf32, #tpu.memory_space<vmem>>, vector<1x320xf32>
    %5 = vector.broadcast %4 : vector<1x320xf32> to vector<256x320xf32>
    %6 = arith.addf %3, %5 : vector<256x320xf32>
    %cst_5 = arith.constant 0.000000e+00 : f32
    %7 = vector.broadcast %cst_5 : f32 to vector<256x320xf32>
    %8 = arith.maximumf %6, %7 : vector<256x320xf32>
    %c0_6 = arith.constant 0 : index
    %c0_7 = arith.constant 0 : index
    %9 = vector.load %arg4[%c0_6, %c0_7] : memref<1x320xf32, #tpu.memory_space<vmem>>, vector<1x320xf32>
    %10 = vector.broadcast %9 : vector<1x320xf32> to vector<256x320xf32>
    %11 = arith.mulf %8, %10 : vector<256x320xf32>
    %cst_8 = arith.constant dense<0.000000e+00> : vector<256xf32>
    %12 = vector.multi_reduction <add>, %11, %cst_8 [1] : vector<256x320xf32> to vector<256xf32>
    %13 = vector.shape_cast %12 : vector<256xf32> to vector<256x1xf32>
    %c0_9 = arith.constant 0 : index
    %c0_10 = arith.constant 0 : index
    %14 = memref.load %arg5[%c0_9, %c0_10] : memref<1x1xf32, #tpu.memory_space<smem>>
    %15 = vector.broadcast %14 : f32 to vector<256x1xf32>
    %16 = arith.addf %13, %15 : vector<256x1xf32>
    %cst_11 = arith.constant 0.000000e+00 : f32
    %17 = vector.broadcast %cst_11 : f32 to vector<256x1xf32>
    %18 = arith.subf %17, %16 : vector<256x1xf32>
    %19 = math.exp %18 : vector<256x1xf32>
    %cst_12 = arith.constant 1.000000e+00 : f32
    %20 = vector.broadcast %cst_12 : f32 to vector<256x1xf32>
    %21 = arith.addf %20, %19 : vector<256x1xf32>
    %cst_13 = arith.constant 1.000000e+00 : f32
    %22 = vector.broadcast %cst_13 : f32 to vector<256x1xf32>
    %23 = arith.divf %22, %21 : vector<256x1xf32>
    %c0_14 = arith.constant 0 : index
    %c0_15 = arith.constant 0 : index
    %24 = vector.load %arg6[%c0_14, %c0_15] : memref<256x1xf32, #tpu.memory_space<vmem>>, vector<256x1xf32>
    tpu.vector_store %arg6[%c0_14, %c0_15], %23 {strides = array<i32>} : memref<256x1xf32, #tpu.memory_space<vmem>>, vector<256x1xf32>,
    return
  }
  func.func @transform_0(%arg0: i32) -> (i32, i32) {
    %c0_i32 = arith.constant 0 : i32
    %c0_i32_0 = arith.constant 0 : i32
    return %arg0, %c0_i32 : i32, i32
  }
  func.func @transform_1(%arg0: i32) -> (i32, i32) {
    %c0_i32 = arith.constant 0 : i32
    %c0_i32_0 = arith.constant 0 : i32
    %c0_i32_1 = arith.constant 0 : i32
    return %c0_i32, %c0_i32_0 : i32, i32
  }
  func.func @transform_2(%arg0: i32) -> (i32, i32) {
    %c0_i32 = arith.constant 0 : i32
    %c0_i32_0 = arith.constant 0 : i32
    %c0_i32_1 = arith.constant 0 : i32
    return %c0_i32, %c0_i32_0 : i32, i32
  }
  func.func @transform_3(%arg0: i32) -> (i32, i32) {
    %c0_i32 = arith.constant 0 : i32
    %c0_i32_0 = arith.constant 0 : i32
    %c0_i32_1 = arith.constant 0 : i32
    return %c0_i32, %c0_i32_0 : i32, i32
  }
  func.func @transform_4(%arg0: i32) -> (i32, i32) {
    %c0_i32 = arith.constant 0 : i32
    %c0_i32_0 = arith.constant 0 : i32
    %c0_i32_1 = arith.constant 0 : i32
    return %c0_i32, %c0_i32_0 : i32, i32
  }
  func.func @transform_5(%arg0: i32) -> (i32, i32) {
    %c0_i32 = arith.constant 0 : i32
    %c0_i32_0 = arith.constant 0 : i32
    return %arg0, %c0_i32 : i32, i32
  }
}

</mosaic_0001>

<llo_original>
// kernel: linear_prototype_fwd.1
$region0: #{linear_prototype_fwd.1}
  #allocation0 [shape = 'u32[]', space=smem, size = 0x4, offset = 0x4, fixed_abs, tag = 'smem constant byte address 0x4 - core index']
  #allocation1 [shape = 'u32[72,128]{1,0:T(1,128)}', space=vmem, size = 0x9000, scoped, tag = 'internal scratch']
  #allocation2 [shape = 'f32[1,1]{1,0:T(1,128)S(6)}', space=smem, size = 0x200, scoped, tag = 'scoped memory for linear_prototype_fwd.1']
  %s0 = inlined_call_operand.vmem [shape: f32[256,256], index: 0, kind: input, shape index: {}]
  %s1 = inlined_call_operand.vmem [shape: bf16[256,320], index: 1, kind: input, shape index: {}]
  %s2 = inlined_call_operand.vmem [shape: f32[1,320], index: 2, kind: input, shape index: {}]
  %s3 = inlined_call_operand.vmem [shape: f32[1,320], index: 3, kind: input, shape index: {}]
  %s4 = inlined_call_operand.<no memory space> [shape: f32[1,1], index: 4, kind: input, shape index: {}]
  %s5 = inlined_call_operand.vmem [shape: f32[256,1], index: 5, kind: output, shape index: {}]
  %s6 = sld [smem:[#allocation0]]
  $region30: #{linear_prototype_fwd.1} parent=0
    _
  %s8 = ssub.s32 1, %s6
  %s9 = scalar_select 0, %s8, %s6
  %10 = sst [smem:[#allocation2]] %s4
  // Predicated region
  $region2: #{linear_prototype_fwd.1} parent=0 // pred_check
    _
  $region3: #{linear_prototype_fwd.1} parent=0 // pred_check_branch
    %12 = sbr.rel (0) target = $region5
  $region4: #{linear_prototype_fwd.1} parent=0 // pred_region
    _
  $region5: #{linear_prototype_fwd.1} parent=0 // pred_fallthru
    _
  // Predicated region
  $region6: #{linear_prototype_fwd.1} parent=0 // pred_check
    _
  $region7: #{linear_prototype_fwd.1} parent=0 // pred_check_branch
    %14 = sbr.rel (0) target = $region9
  $region8: #{linear_prototype_fwd.1} parent=0 // pred_region
    _
  $region9: #{linear_prototype_fwd.1} parent=0 // pred_fallthru
    _
  // Predicated region
  $region10: #{linear_prototype_fwd.1} parent=0 // pred_check
    _
  $region11: #{linear_prototype_fwd.1} parent=0 // pred_check_branch
    %16 = sbr.rel (0) target = $region13
  $region12: #{linear_prototype_fwd.1} parent=0 // pred_region
    _
  $region13: #{linear_prototype_fwd.1} parent=0 // pred_fallthru
    _
  // Predicated region
  $region14: #{linear_prototype_fwd.1} parent=0 // pred_check
    _
  $region15: #{linear_prototype_fwd.1} parent=0 // pred_check_branch
    %18 = sbr.rel (0) target = $region17
  $region16: #{linear_prototype_fwd.1} parent=0 // pred_region
    _
  $region17: #{linear_prototype_fwd.1} parent=0 // pred_fallthru
    _
  // Predicated region
  $region18: #{linear_prototype_fwd.1} parent=0 // pred_check
    _
  $region19: #{linear_prototype_fwd.1} parent=0 // pred_check_branch
    %20 = sbr.rel (0) target = $region21
  $region20: #{linear_prototype_fwd.1} parent=0 // pred_region
    _
  $region21: #{linear_prototype_fwd.1} parent=0 // pred_fallthru
    _
  %v21 = vld [vmem:[%s0] sm:$0xff]
  %v22 = vld [vmem:[%s0 + $0x8] sm:$0xff]
  %v23 = vld [vmem:[%s0 + $0x10] sm:$0xff]
  %v24 = vld [vmem:[%s0 + $0x18] sm:$0xff]
  %v25 = vld [vmem:[%s0 + $0x20] sm:$0xff]
  %v26 = vld [vmem:[%s0 + $0x28] sm:$0xff]
  %v27 = vld [vmem:[%s0 + $0x30] sm:$0xff]
  %v28 = vld [vmem:[%s0 + $0x38] sm:$0xff]
  %v29 = vld [vmem:[%s0 + $0x40] sm:$0xff]
  %v30 = vld [vmem:[%s0 + $0x48] sm:$0xff]
  %v31 = vld [vmem:[%s0 + $0x50] sm:$0xff]
  %v32 = vld [vmem:[%s0 + $0x58] sm:$0xff]
  %v33 = vld [vmem:[%s0 + $0x60] sm:$0xff]
  %v34 = vld [vmem:[%s0 + $0x68] sm:$0xff]
  %v35 = vld [vmem:[%s0 + $0x70] sm:$0xff]
  %v36 = vld [vmem:[%s0 + $0x78] sm:$0xff]
  %v37 = vld [vmem:[%s0 + $0x80] sm:$0xff]
  %v38 = vld [vmem:[%s0 + $0x88] sm:$0xff]
  %v39 = vld [vmem:[%s0 + $0x90] sm:$0xff]
  %v40 = vld [vmem:[%s0 + $0x98] sm:$0xff]
  %v41 = vld [vmem:[%s0 + $0xa0] sm:$0xff]
  %v42 = vld [vmem:[%s0 + $0xa8] sm:$0xff]
  %v43 = vld [vmem:[%s0 + $0xb0] sm:$0xff]
  %v44 = vld [vmem:[%s0 + $0xb8] sm:$0xff]
  %v45 = vld [vmem:[%s0 + $0xc0] sm:$0xff]
  %v46 = vld [vmem:[%s0 + $0xc8] sm:$0xff]
  %v47 = vld [vmem:[%s0 + $0xd0] sm:$0xff]
  %v48 = vld [vmem:[%s0 + $0xd8] sm:$0xff]
  %v49 = vld [vmem:[%s0 + $0xe0] sm:$0xff]
  %v50 = vld [vmem:[%s0 + $0xe8] sm:$0xff]
  %v51 = vld [vmem:[%s0 + $0xf0] sm:$0xff]
  %v52 = vld [vmem:[%s0 + $0xf8] sm:$0xff]
  %v53 = vld [vmem:[%s0 + $0x100] sm:$0xff]
  %v54 = vld [vmem:[%s0 + $0x108] sm:$0xff]
  %v55 = vld [vmem:[%s0 + $0x110] sm:$0xff]
  %v56 = vld [vmem:[%s0 + $0x118] sm:$0xff]
  %v57 = vld [vmem:[%s0 + $0x120] sm:$0xff]
  %v58 = vld [vmem:[%s0 + $0x128] sm:$0xff]
  %v59 = vld [vmem:[%s0 + $0x130] sm:$0xff]
  %v60 = vld [vmem:[%s0 + $0x138] sm:$0xff]
  %v61 = vld [vmem:[%s0 + $0x140] sm:$0xff]
  %v62 = vld [vmem:[%s0 + $0x148] sm:$0xff]
  %v63 = vld [vmem:[%s0 + $0x150] sm:$0xff]
  %v64 = vld [vmem:[%s0 + $0x158] sm:$0xff]
  %v65 = vld [vmem:[%s0 + $0x160] sm:$0xff]
  %v66 = vld [vmem:[%s0 + $0x168] sm:$0xff]
  %v67 = vld [vmem:[%s0 + $0x170] sm:$0xff]
  %v68 = vld [vmem:[%s0 + $0x178] sm:$0xff]
  %v69 = vld [vmem:[%s0 + $0x180] sm:$0xff]
  %v70 = vld [vmem:[%s0 + $0x188] sm:$0xff]
  %v71 = vld [vmem:[%s0 + $0x190] sm:$0xff]
  %v72 = vld [vmem:[%s0 + $0x198] sm:$0xff]
  %v73 = vld [vmem:[%s0 + $0x1a0] sm:$0xff]
  %v74 = vld [vmem:[%s0 + $0x1a8] sm:$0xff]
  %v75 = vld [vmem:[%s0 + $0x1b0] sm:$0xff]
  %v76 = vld [vmem:[%s0 + $0x1b8] sm:$0xff]
  %v77 = vld [vmem:[%s0 + $0x1c0] sm:$0xff]
  %v78 = vld [vmem:[%s0 + $0x1c8] sm:$0xff]
  %v79 = vld [vmem:[%s0 + $0x1d0] sm:$0xff]
  %v80 = vld [vmem:[%s0 + $0x1d8] sm:$0xff]
  %v81 = vld [vmem:[%s0 + $0x1e0] sm:$0xff]
  %v82 = vld [vmem:[%s0 + $0x1e8] sm:$0xff]
  %v83 = vld [vmem:[%s0 + $0x1f0] sm:$0xff]
  %v84 = vld [vmem:[%s0 + $0x1f8] sm:$0xff]
  %v85 = vpack.c.bf16 %v23, %v21
  %v86 = vpack.c.bf16 %v24, %v22
  %v87 = vpack.c.bf16 %v27, %v25
  %v88 = vpack.c.bf16 %v28, %v26
  %v89 = vpack.c.bf16 %v31, %v29
  %v90 = vpack.c.bf16 %v32, %v30
  %v91 = vpack.c.bf16 %v35, %v33
  %v92 = vpack.c.bf16 %v36, %v34
  %v93 = vpack.c.bf16 %v39, %v37
  %v94 = vpack.c.bf16 %v40, %v38
  %v95 = vpack.c.bf16 %v43, %v41
  %v96 = vpack.c.bf16 %v44, %v42
  %v97 = vpack.c.bf16 %v47, %v45
  %v98 = vpack.c.bf16 %v48, %v46
  %v99 = vpack.c.bf16 %v51, %v49
  %v100 = vpack.c.bf16 %v52, %v50
  %v101 = vpack.c.bf16 %v55, %v53
  %v102 = vpack.c.bf16 %v56, %v54
  %v103 = vpack.c.bf16 %v59, %v57
  %v104 = vpack.c.bf16 %v60, %v58
  %v105 = vpack.c.bf16 %v63, %v61
  %v106 = vpack.c.bf16 %v64, %v62
  %v107 = vpack.c.bf16 %v67, %v65
  %v108 = vpack.c.bf16 %v68, %v66
  %v109 = vpack.c.bf16 %v71, %v69
  %v110 = vpack.c.bf16 %v72, %v70
  %v111 = vpack.c.bf16 %v75, %v73
  %v112 = vpack.c.bf16 %v76, %v74
  %v113 = vpack.c.bf16 %v79, %v77
  %v114 = vpack.c.bf16 %v80, %v78
  %v115 = vpack.c.bf16 %v83, %v81
  %v116 = vpack.c.bf16 %v84, %v82
  %v117 = vld [vmem:[%s1] sm:$0xff]
  %v118 = vld [vmem:[%s1 + $0x8] sm:$0xf]
  %v119 = vld [vmem:[%s1 + $0xc] sm:$0xff]
  %v120 = vld [vmem:[%s1 + $0x14] sm:$0xf]
  %v121 = vld [vmem:[%s1 + $0x18] sm:$0xff]
  %v122 = vld [vmem:[%s1 + $0x20] sm:$0xf]
  %v123 = vld [vmem:[%s1 + $0x24] sm:$0xff]
  %v124 = vld [vmem:[%s1 + $0x2c] sm:$0xf]
  %v125 = vld [vmem:[%s1 + $0x30] sm:$0xff]
  %v126 = vld [vmem:[%s1 + $0x38] sm:$0xf]
  %v127 = vld [vmem:[%s1 + $0x3c] sm:$0xff]
  %v128 = vld [vmem:[%s1 + $0x44] sm:$0xf]
  %v129 = vld [vmem:[%s1 + $0x48] sm:$0xff]
  %v130 = vld [vmem:[%s1 + $0x50] sm:$0xf]
  %v131 = vld [vmem:[%s1 + $0x54] sm:$0xff]
  %v132 = vld [vmem:[%s1 + $0x5c] sm:$0xf]
  %v133 = vld [vmem:[%s1 + $0x60] sm:$0xff]
  %v134 = vld [vmem:[%s1 + $0x68] sm:$0xf]
  %v135 = vld [vmem:[%s1 + $0x6c] sm:$0xff]
  %v136 = vld [vmem:[%s1 + $0x74] sm:$0xf]
  %v137 = vld [vmem:[%s1 + $0x78] sm:$0xff]
  %v138 = vld [vmem:[%s1 + $0x80] sm:$0xf]
  %v139 = vld [vmem:[%s1 + $0x84] sm:$0xff]
  %v140 = vld [vmem:[%s1 + $0x8c] sm:$0xf]
  %v141 = vld [vmem:[%s1 + $0x90] sm:$0xff]
  %v142 = vld [vmem:[%s1 + $0x98] sm:$0xf]
  %v143 = vld [vmem:[%s1 + $0x9c] sm:$0xff]
  %v144 = vld [vmem:[%s1 + $0xa4] sm:$0xf]
  %v145 = vld [vmem:[%s1 + $0xa8] sm:$0xff]
  %v146 = vld [vmem:[%s1 + $0xb0] sm:$0xf]
  %v147 = vld [vmem:[%s1 + $0xb4] sm:$0xff]
  %v148 = vld [vmem:[%s1 + $0xbc] sm:$0xf]
  %v149 = vld [vmem:[%s1 + $0xc0] sm:$0xff]
  %v150 = vld [vmem:[%s1 + $0xc8] sm:$0xf]
  %v151 = vld [vmem:[%s1 + $0xcc] sm:$0xff]
  %v152 = vld [vmem:[%s1 + $0xd4] sm:$0xf]
  %v153 = vld [vmem:[%s1 + $0xd8] sm:$0xff]
  %v154 = vld [vmem:[%s1 + $0xe0] sm:$0xf]
  %v155 = vld [vmem:[%s1 + $0xe4] sm:$0xff]
  %v156 = vld [vmem:[%s1 + $0xec] sm:$0xf]
  %v157 = vld [vmem:[%s1 + $0xf0] sm:$0xff]
  %v158 = vld [vmem:[%s1 + $0xf8] sm:$0xf]
  %v159 = vld [vmem:[%s1 + $0xfc] sm:$0xff]
  %v160 = vld [vmem:[%s1 + $0x104] sm:$0xf]
  %v161 = vld [vmem:[%s1 + $0x108] sm:$0xff]
  %v162 = vld [vmem:[%s1 + $0x110] sm:$0xf]
  %v163 = vld [vmem:[%s1 + $0x114] sm:$0xff]
  %v164 = vld [vmem:[%s1 + $0x11c] sm:$0xf]
  %v165 = vld [vmem:[%s1 + $0x120] sm:$0xff]
  %v166 = vld [vmem:[%s1 + $0x128] sm:$0xf]
  %v167 = vld [vmem:[%s1 + $0x12c] sm:$0xff]
  %v168 = vld [vmem:[%s1 + $0x134] sm:$0xf]
  %v169 = vld [vmem:[%s1 + $0x138] sm:$0xff]
  %v170 = vld [vmem:[%s1 + $0x140] sm:$0xf]
  %v171 = vld [vmem:[%s1 + $0x144] sm:$0xff]
  %v172 = vld [vmem:[%s1 + $0x14c] sm:$0xf]
  %v173 = vld [vmem:[%s1 + $0x150] sm:$0xff]
  %v174 = vld [vmem:[%s1 + $0x158] sm:$0xf]
  %v175 = vld [vmem:[%s1 + $0x15c] sm:$0xff]
  %v176 = vld [vmem:[%s1 + $0x164] sm:$0xf]
  %v177 = vld [vmem:[%s1 + $0x168] sm:$0xff]
  %v178 = vld [vmem:[%s1 + $0x170] sm:$0xf]
  %v179 = vld [vmem:[%s1 + $0x174] sm:$0xff]
  %v180 = vld [vmem:[%s1 + $0x17c] sm:$0xf]
  %v181 = vld [vmem:[%s2] sm:$0x7]
  %v183 = vperm.slane %v181, 0
  %v184 = vperm.slane %v181, 1
  %v185 = vperm.slane %v181, 2
  %v253 = vunpack.c.l.b16 %v117
  %v254 = vunpack.c.h.b16 %v117
  %v255 = vunpack.c.l.b16 %v118
  %v256 = vunpack.c.l.b16 %v119
  %v257 = vunpack.c.h.b16 %v119
  %v258 = vunpack.c.l.b16 %v120
  %v259 = vunpack.c.l.b16 %v121
  %v260 = vunpack.c.h.b16 %v121
  %v261 = vunpack.c.l.b16 %v122
  %v262 = vunpack.c.l.b16 %v123
  %v263 = vunpack.c.h.b16 %v123
  %v264 = vunpack.c.l.b16 %v124
  %v265 = vunpack.c.l.b16 %v125
  %v266 = vunpack.c.h.b16 %v125
  %v267 = vunpack.c.l.b16 %v126
  %v268 = vunpack.c.l.b16 %v127
  %v269 = vunpack.c.h.b16 %v127
  %v270 = vunpack.c.l.b16 %v128
  %v271 = vunpack.c.l.b16 %v129
  %v272 = vunpack.c.h.b16 %v129
  %v273 = vunpack.c.l.b16 %v130
  %v274 = vunpack.c.l.b16 %v131
  %v275 = vunpack.c.h.b16 %v131
  %v276 = vunpack.c.l.b16 %v132
  %v277 = vunpack.c.l.b16 %v133
  %v278 = vunpack.c.h.b16 %v133
  %v279 = vunpack.c.l.b16 %v134
  %v280 = vunpack.c.l.b16 %v135
  %v281 = vunpack.c.h.b16 %v135
  %v282 = vunpack.c.l.b16 %v136
  %v283 = vunpack.c.l.b16 %v137
  %v284 = vunpack.c.h.b16 %v137
  %v285 = vunpack.c.l.b16 %v138
  %v286 = vunpack.c.l.b16 %v139
  %v287 = vunpack.c.h.b16 %v139
  %v288 = vunpack.c.l.b16 %v140
  %v289 = vunpack.c.l.b16 %v141
  %v290 = vunpack.c.h.b16 %v141
  %v291 = vunpack.c.l.b16 %v142
  %v292 = vunpack.c.l.b16 %v143
  %v293 = vunpack.c.h.b16 %v143
  %v294 = vunpack.c.l.b16 %v144
  %v295 = vunpack.c.l.b16 %v145
  %v296 = vunpack.c.h.b16 %v145
  %v297 = vunpack.c.l.b16 %v146
  %v298 = vunpack.c.l.b16 %v147
  %v299 = vunpack.c.h.b16 %v147
  %v300 = vunpack.c.l.b16 %v148
  %v301 = vunpack.c.l.b16 %v149
  %v302 = vunpack.c.h.b16 %v149
  %v303 = vunpack.c.l.b16 %v150
  %v304 = vunpack.c.l.b16 %v151
  %v305 = vunpack.c.h.b16 %v151
  %v306 = vunpack.c.l.b16 %v152
  %v307 = vunpack.c.l.b16 %v153
  %v308 = vunpack.c.h.b16 %v153
  %v309 = vunpack.c.l.b16 %v154
  %v310 = vunpack.c.l.b16 %v155
  %v311 = vunpack.c.h.b16 %v155
  %v312 = vunpack.c.l.b16 %v156
  %v313 = vunpack.c.l.b16 %v157
  %v314 = vunpack.c.h.b16 %v157
  %v315 = vunpack.c.l.b16 %v158
  %v316 = vunpack.c.l.b16 %v159
  %v317 = vunpack.c.h.b16 %v159
  %v318 = vunpack.c.l.b16 %v160
  %v319 = vunpack.c.l.b16 %v161
  %v320 = vunpack.c.h.b16 %v161
  %v321 = vunpack.c.l.b16 %v162
  %v322 = vunpack.c.l.b16 %v163
  %v323 = vunpack.c.h.b16 %v163
  %v324 = vunpack.c.l.b16 %v164
  %v325 = vunpack.c.l.b16 %v165
  %v326 = vunpack.c.h.b16 %v165
  %v327 = vunpack.c.l.b16 %v166
  %v328 = vunpack.c.l.b16 %v167
  %v329 = vunpack.c.h.b16 %v167
  %v330 = vunpack.c.l.b16 %v168
  %v331 = vunpack.c.l.b16 %v169
  %v332 = vunpack.c.h.b16 %v169
  %v333 = vunpack.c.l.b16 %v170
  %v334 = vunpack.c.l.b16 %v171
  %v335 = vunpack.c.h.b16 %v171
  %v336 = vunpack.c.l.b16 %v172
  %v337 = vunpack.c.l.b16 %v173
  %v338 = vunpack.c.h.b16 %v173
  %v339 = vunpack.c.l.b16 %v174
  %v340 = vunpack.c.l.b16 %v175
  %v341 = vunpack.c.h.b16 %v175
  %v342 = vunpack.c.l.b16 %v176
  %v343 = vunpack.c.l.b16 %v177
  %v344 = vunpack.c.h.b16 %v177
  %v345 = vunpack.c.l.b16 %v178
  %v346 = vunpack.c.l.b16 %v179
  %v347 = vunpack.c.h.b16 %v179
  %v348 = vunpack.c.l.b16 %v180
  %v349 = vpack.c.b16 %v256, %v253
  %v350 = vpack.c.b16 %v257, %v254
  %v351 = vpack.c.b16 %v258, %v255
  %v352 = vpack.c.b16 %v262, %v259
  %v353 = vpack.c.b16 %v263, %v260
  %v354 = vpack.c.b16 %v264, %v261
  %v355 = vpack.c.b16 %v268, %v265
  %v356 = vpack.c.b16 %v269, %v266
  %v357 = vpack.c.b16 %v270, %v267
  %v358 = vpack.c.b16 %v274, %v271
  %v359 = vpack.c.b16 %v275, %v272
  %v360 = vpack.c.b16 %v276, %v273
  %v361 = vpack.c.b16 %v280, %v277
  %v362 = vpack.c.b16 %v281, %v278
  %v363 = vpack.c.b16 %v282, %v279
  %v364 = vpack.c.b16 %v286, %v283
  %v365 = vpack.c.b16 %v287, %v284
  %v366 = vpack.c.b16 %v288, %v285
  %v367 = vpack.c.b16 %v292, %v289
  %v368 = vpack.c.b16 %v293, %v290
  %v369 = vpack.c.b16 %v294, %v291
  %v370 = vpack.c.b16 %v298, %v295
  %v371 = vpack.c.b16 %v299, %v296
  %v372 = vpack.c.b16 %v300, %v297
  %v373 = vpack.c.b16 %v304, %v301
  %v374 = vpack.c.b16 %v305, %v302
  %v375 = vpack.c.b16 %v306, %v303
  %v376 = vpack.c.b16 %v310, %v307
  %v377 = vpack.c.b16 %v311, %v308
  %v378 = vpack.c.b16 %v312, %v309
  %v379 = vpack.c.b16 %v316, %v313
  %v380 = vpack.c.b16 %v317, %v314
  %v381 = vpack.c.b16 %v318, %v315
  %v382 = vpack.c.b16 %v322, %v319
  %v383 = vpack.c.b16 %v323, %v320
  %v384 = vpack.c.b16 %v324, %v321
  %v385 = vpack.c.b16 %v328, %v325
  %v386 = vpack.c.b16 %v329, %v326
  %v387 = vpack.c.b16 %v330, %v327
  %v388 = vpack.c.b16 %v334, %v331
  %v389 = vpack.c.b16 %v335, %v332
  %v390 = vpack.c.b16 %v336, %v333
  %v391 = vpack.c.b16 %v340, %v337
  %v392 = vpack.c.b16 %v341, %v338
  %v393 = vpack.c.b16 %v342, %v339
  %v394 = vpack.c.b16 %v346, %v343
  %v395 = vpack.c.b16 %v347, %v344
  %v396 = vpack.c.b16 %v348, %v345
  %445 = vmatpush.bf16.msra.mxu0 %v370
  %446 = vmatpush.bf16.msra.mxu0 %v367
  %447 = vmatpush.bf16.msra.mxu0 %v364
  %448 = vmatpush.bf16.msra.mxu0 %v361
  %449 = vmatpush.bf16.msra.mxu0 %v358
  %450 = vmatpush.bf16.msra.mxu0 %v355
  %451 = vmatpush.bf16.msra.mxu0 %v352
  %452 = vmatpush.bf16.msra.mxu0 %v349
  %453 = vmatmul.bf16.gmra.mxu0 %v85
  %v454 = vpop.f32.mrf.mxu0
  %v455 = vadd.f32 %v183, %v454
  %v456 = vpop.f32.mrf.mxu0
  %v457 = vadd.f32 %v183, %v456
  %458 = vmatmul.bf16.gmra.mxu0 %v87
  %v459 = vpop.f32.mrf.mxu0
  %v460 = vadd.f32 %v183, %v459
  %v461 = vpop.f32.mrf.mxu0
  %v462 = vadd.f32 %v183, %v461
  %463 = vmatmul.bf16.gmra.mxu0 %v89
  %v464 = vpop.f32.mrf.mxu0
  %v465 = vadd.f32 %v183, %v464
  %v466 = vpop.f32.mrf.mxu0
  %v467 = vadd.f32 %v183, %v466
  %468 = vmatmul.bf16.gmra.mxu0 %v91
  %v469 = vpop.f32.mrf.mxu0
  %v470 = vadd.f32 %v183, %v469
  %v471 = vpop.f32.mrf.mxu0
  %v472 = vadd.f32 %v183, %v471
  %473 = vmatmul.bf16.gmra.mxu0 %v93
  %v474 = vpop.f32.mrf.mxu0
  %v475 = vadd.f32 %v183, %v474
  %v476 = vpop.f32.mrf.mxu0
  %v477 = vadd.f32 %v183, %v476
  %478 = vmatmul.bf16.gmra.mxu0 %v95
  %v479 = vpop.f32.mrf.mxu0
  %v480 = vadd.f32 %v183, %v479
  %v481 = vpop.f32.mrf.mxu0
  %v482 = vadd.f32 %v183, %v481
  %483 = vmatmul.bf16.gmra.mxu0 %v97
  %v484 = vpop.f32.mrf.mxu0
  %v485 = vadd.f32 %v183, %v484
  %v486 = vpop.f32.mrf.mxu0
  %v487 = vadd.f32 %v183, %v486
  %488 = vmatmul.bf16.gmra.mxu0 %v99
  %v489 = vpop.f32.mrf.mxu0
  %v490 = vadd.f32 %v183, %v489
  %v491 = vpop.f32.mrf.mxu0
  %v492 = vadd.f32 %v183, %v491
  %493 = vmatmul.bf16.gmra.mxu0 %v101
  %v494 = vpop.f32.mrf.mxu0
  %v495 = vadd.f32 %v183, %v494
  %v496 = vpop.f32.mrf.mxu0
  %v497 = vadd.f32 %v183, %v496
  %498 = vmatmul.bf16.gmra.mxu0 %v103
  %v499 = vpop.f32.mrf.mxu0
  %v500 = vadd.f32 %v183, %v499
  %v501 = vpop.f32.mrf.mxu0
  %v502 = vadd.f32 %v183, %v501
  %503 = vmatmul.bf16.gmra.mxu0 %v105
  %v504 = vpop.f32.mrf.mxu0
  %v505 = vadd.f32 %v183, %v504
  %v506 = vpop.f32.mrf.mxu0
  %v507 = vadd.f32 %v183, %v506
  %508 = vmatmul.bf16.gmra.mxu0 %v107
  %v509 = vpop.f32.mrf.mxu0
  %v510 = vadd.f32 %v183, %v509
  %v511 = vpop.f32.mrf.mxu0
  %v512 = vadd.f32 %v183, %v511
  %513 = vmatmul.bf16.gmra.mxu0 %v109
  %v514 = vpop.f32.mrf.mxu0
  %v515 = vadd.f32 %v183, %v514
  %v516 = vpop.f32.mrf.mxu0
  %v517 = vadd.f32 %v183, %v516
  %518 = vmatmul.bf16.gmra.mxu0 %v111
  %v519 = vpop.f32.mrf.mxu0
  %v520 = vadd.f32 %v183, %v519
  %v521 = vpop.f32.mrf.mxu0
  %v522 = vadd.f32 %v183, %v521
  %523 = vmatmul.bf16.gmra.mxu0 %v113
  %v524 = vpop.f32.mrf.mxu0
  %v525 = vadd.f32 %v183, %v524
  %v526 = vpop.f32.mrf.mxu0
  %v527 = vadd.f32 %v183, %v526
  %528 = vmatmul.bf16.gmra.mxu0 %v115
  %v529 = vpop.f32.mrf.mxu0
  %v530 = vadd.f32 %v183, %v529
  %v531 = vpop.f32.mrf.mxu0
  %v532 = vadd.f32 %v183, %v531
  %533 = vdwg.mxu0
  %534 = vmatpush.bf16.msra.mxu0 %v394
  %535 = vmatpush.bf16.msra.mxu0 %v391
  %536 = vmatpush.bf16.msra.mxu0 %v388
  %537 = vmatpush.bf16.msra.mxu0 %v385
  %538 = vmatpush.bf16.msra.mxu0 %v382
  %539 = vmatpush.bf16.msra.mxu0 %v379
  %540 = vmatpush.bf16.msra.mxu0 %v376
  %541 = vmatpush.bf16.msra.mxu0 %v373
  %542 = vmatmul.bf16.gmra.mxu0 %v86
  %v543 = vpop.f32.mrf.mxu0
  %v544 = vadd.f32 %v455, %v543
  %v545 = vpop.f32.mrf.mxu0
  %v546 = vadd.f32 %v457, %v545
  %547 = vmatmul.bf16.gmra.mxu0 %v88
  %v548 = vpop.f32.mrf.mxu0
  %v549 = vadd.f32 %v460, %v548
  %v550 = vpop.f32.mrf.mxu0
  %v551 = vadd.f32 %v462, %v550
  %552 = vmatmul.bf16.gmra.mxu0 %v90
  %v553 = vpop.f32.mrf.mxu0
  %v554 = vadd.f32 %v465, %v553
  %v555 = vpop.f32.mrf.mxu0
  %v556 = vadd.f32 %v467, %v555
  %557 = vmatmul.bf16.gmra.mxu0 %v92
  %v558 = vpop.f32.mrf.mxu0
  %v559 = vadd.f32 %v470, %v558
  %v560 = vpop.f32.mrf.mxu0
  %v561 = vadd.f32 %v472, %v560
  %562 = vmatmul.bf16.gmra.mxu0 %v94
  %v563 = vpop.f32.mrf.mxu0
  %v564 = vadd.f32 %v475, %v563
  %v565 = vpop.f32.mrf.mxu0
  %v566 = vadd.f32 %v477, %v565
  %567 = vmatmul.bf16.gmra.mxu0 %v96
  %v568 = vpop.f32.mrf.mxu0
  %v569 = vadd.f32 %v480, %v568
  %v570 = vpop.f32.mrf.mxu0
  %v571 = vadd.f32 %v482, %v570
  %572 = vmatmul.bf16.gmra.mxu0 %v98
  %v573 = vpop.f32.mrf.mxu0
  %v574 = vadd.f32 %v485, %v573
  %v575 = vpop.f32.mrf.mxu0
  %v576 = vadd.f32 %v487, %v575
  %577 = vmatmul.bf16.gmra.mxu0 %v100
  %v578 = vpop.f32.mrf.mxu0
  %v579 = vadd.f32 %v490, %v578
  %v580 = vpop.f32.mrf.mxu0
  %v581 = vadd.f32 %v492, %v580
  %582 = vmatmul.bf16.gmra.mxu0 %v102
  %v583 = vpop.f32.mrf.mxu0
  %v584 = vadd.f32 %v495, %v583
  %v585 = vpop.f32.mrf.mxu0
  %v586 = vadd.f32 %v497, %v585
  %587 = vmatmul.bf16.gmra.mxu0 %v104
  %v588 = vpop.f32.mrf.mxu0
  %v589 = vadd.f32 %v500, %v588
  %v590 = vpop.f32.mrf.mxu0
  %v591 = vadd.f32 %v502, %v590
  %592 = vmatmul.bf16.gmra.mxu0 %v106
  %v593 = vpop.f32.mrf.mxu0
  %v594 = vadd.f32 %v505, %v593
  %v595 = vpop.f32.mrf.mxu0
  %v596 = vadd.f32 %v507, %v595
  %597 = vmatmul.bf16.gmra.mxu0 %v108
  %v598 = vpop.f32.mrf.mxu0
  %v599 = vadd.f32 %v510, %v598
  %v600 = vpop.f32.mrf.mxu0
  %v601 = vadd.f32 %v512, %v600
  %602 = vmatmul.bf16.gmra.mxu0 %v110
  %v603 = vpop.f32.mrf.mxu0
  %v604 = vadd.f32 %v515, %v603
  %v605 = vpop.f32.mrf.mxu0
  %v606 = vadd.f32 %v517, %v605
  %607 = vmatmul.bf16.gmra.mxu0 %v112
  %v608 = vpop.f32.mrf.mxu0
  %v609 = vadd.f32 %v520, %v608
  %v610 = vpop.f32.mrf.mxu0
  %v611 = vadd.f32 %v522, %v610
  %612 = vmatmul.bf16.gmra.mxu0 %v114
  %v613 = vpop.f32.mrf.mxu0
  %v614 = vadd.f32 %v525, %v613
  %v615 = vpop.f32.mrf.mxu0
  %v616 = vadd.f32 %v527, %v615
  %617 = vmatmul.bf16.gmra.mxu0 %v116
  %v618 = vpop.f32.mrf.mxu0
  %v619 = vadd.f32 %v530, %v618
  %v620 = vpop.f32.mrf.mxu0
  %v621 = vadd.f32 %v532, %v620
  %622 = vdwg.mxu0
  %623 = vmatpush.bf16.msra.mxu0 %v371
  %624 = vmatpush.bf16.msra.mxu0 %v368
  %625 = vmatpush.bf16.msra.mxu0 %v365
  %626 = vmatpush.bf16.msra.mxu0 %v362
  %627 = vmatpush.bf16.msra.mxu0 %v359
  %628 = vmatpush.bf16.msra.mxu0 %v356
  %629 = vmatpush.bf16.msra.mxu0 %v353
  %630 = vmatpush.bf16.msra.mxu0 %v350
  %631 = vmatmul.bf16.gmra.mxu0 %v85
  %v632 = vpop.f32.mrf.mxu0
  %v633 = vadd.f32 %v184, %v632
  %v634 = vpop.f32.mrf.mxu0
  %v635 = vadd.f32 %v184, %v634
  %636 = vmatmul.bf16.gmra.mxu0 %v87
  %v637 = vpop.f32.mrf.mxu0
  %v638 = vadd.f32 %v184, %v637
  %v639 = vpop.f32.mrf.mxu0
  %v640 = vadd.f32 %v184, %v639
  %641 = vmatmul.bf16.gmra.mxu0 %v89
  %v642 = vpop.f32.mrf.mxu0
  %v643 = vadd.f32 %v184, %v642
  %v644 = vpop.f32.mrf.mxu0
  %v645 = vadd.f32 %v184, %v644
  %646 = vmatmul.bf16.gmra.mxu0 %v91
  %v647 = vpop.f32.mrf.mxu0
  %v648 = vadd.f32 %v184, %v647
  %v649 = vpop.f32.mrf.mxu0
  %v650 = vadd.f32 %v184, %v649
  %651 = vmatmul.bf16.gmra.mxu0 %v93
  %v652 = vpop.f32.mrf.mxu0
  %v653 = vadd.f32 %v184, %v652
  %v654 = vpop.f32.mrf.mxu0
  %v655 = vadd.f32 %v184, %v654
  %656 = vmatmul.bf16.gmra.mxu0 %v95
  %v657 = vpop.f32.mrf.mxu0
  %v658 = vadd.f32 %v184, %v657
  %v659 = vpop.f32.mrf.mxu0
  %v660 = vadd.f32 %v184, %v659
  %661 = vmatmul.bf16.gmra.mxu0 %v97
  %v662 = vpop.f32.mrf.mxu0
  %v663 = vadd.f32 %v184, %v662
  %v664 = vpop.f32.mrf.mxu0
  %v665 = vadd.f32 %v184, %v664
  %666 = vmatmul.bf16.gmra.mxu0 %v99
  %v667 = vpop.f32.mrf.mxu0
  %v668 = vadd.f32 %v184, %v667
  %v669 = vpop.f32.mrf.mxu0
  %v670 = vadd.f32 %v184, %v669
  %671 = vmatmul.bf16.gmra.mxu0 %v101
  %v672 = vpop.f32.mrf.mxu0
  %v673 = vadd.f32 %v184, %v672
  %v674 = vpop.f32.mrf.mxu0
  %v675 = vadd.f32 %v184, %v674
  %676 = vmatmul.bf16.gmra.mxu0 %v103
  %v677 = vpop.f32.mrf.mxu0
  %v678 = vadd.f32 %v184, %v677
  %v679 = vpop.f32.mrf.mxu0
  %v680 = vadd.f32 %v184, %v679
  %681 = vmatmul.bf16.gmra.mxu0 %v105
  %v682 = vpop.f32.mrf.mxu0
  %v683 = vadd.f32 %v184, %v682
  %v684 = vpop.f32.mrf.mxu0
  %v685 = vadd.f32 %v184, %v684
  %686 = vmatmul.bf16.gmra.mxu0 %v107
  %v687 = vpop.f32.mrf.mxu0
  %v688 = vadd.f32 %v184, %v687
  %v689 = vpop.f32.mrf.mxu0
  %v690 = vadd.f32 %v184, %v689
  %691 = vmatmul.bf16.gmra.mxu0 %v109
  %v692 = vpop.f32.mrf.mxu0
  %v693 = vadd.f32 %v184, %v692
  %v694 = vpop.f32.mrf.mxu0
  %v695 = vadd.f32 %v184, %v694
  %696 = vmatmul.bf16.gmra.mxu0 %v111
  %v697 = vpop.f32.mrf.mxu0
  %v698 = vadd.f32 %v184, %v697
  %v699 = vpop.f32.mrf.mxu0
  %v700 = vadd.f32 %v184, %v699
  %701 = vmatmul.bf16.gmra.mxu0 %v113
  %v702 = vpop.f32.mrf.mxu0
  %v703 = vadd.f32 %v184, %v702
  %v704 = vpop.f32.mrf.mxu0
  %v705 = vadd.f32 %v184, %v704
  %706 = vmatmul.bf16.gmra.mxu0 %v115
  %v707 = vpop.f32.mrf.mxu0
  %v708 = vadd.f32 %v184, %v707
  %v709 = vpop.f32.mrf.mxu0
  %v710 = vadd.f32 %v184, %v709
  %711 = vdwg.mxu0
  %712 = vmatpush.bf16.msra.mxu0 %v395
  %713 = vmatpush.bf16.msra.mxu0 %v392
  %714 = vmatpush.bf16.msra.mxu0 %v389
  %715 = vmatpush.bf16.msra.mxu0 %v386
  %716 = vmatpush.bf16.msra.mxu0 %v383
  %717 = vmatpush.bf16.msra.mxu0 %v380
  %718 = vmatpush.bf16.msra.mxu0 %v377
  %719 = vmatpush.bf16.msra.mxu0 %v374
  %720 = vmatmul.bf16.gmra.mxu0 %v86
  %v721 = vpop.f32.mrf.mxu0
  %v722 = vadd.f32 %v633, %v721
  %v723 = vpop.f32.mrf.mxu0
  %v724 = vadd.f32 %v635, %v723
  %725 = vmatmul.bf16.gmra.mxu0 %v88
  %v726 = vpop.f32.mrf.mxu0
  %v727 = vadd.f32 %v638, %v726
  %v728 = vpop.f32.mrf.mxu0
  %v729 = vadd.f32 %v640, %v728
  %730 = vmatmul.bf16.gmra.mxu0 %v90
  %v731 = vpop.f32.mrf.mxu0
  %v732 = vadd.f32 %v643, %v731
  %v733 = vpop.f32.mrf.mxu0
  %v734 = vadd.f32 %v645, %v733
  %735 = vmatmul.bf16.gmra.mxu0 %v92
  %v736 = vpop.f32.mrf.mxu0
  %v737 = vadd.f32 %v648, %v736
  %v738 = vpop.f32.mrf.mxu0
  %v739 = vadd.f32 %v650, %v738
  %740 = vmatmul.bf16.gmra.mxu0 %v94
  %v741 = vpop.f32.mrf.mxu0
  %v742 = vadd.f32 %v653, %v741
  %v743 = vpop.f32.mrf.mxu0
  %v744 = vadd.f32 %v655, %v743
  %745 = vmatmul.bf16.gmra.mxu0 %v96
  %v746 = vpop.f32.mrf.mxu0
  %v747 = vadd.f32 %v658, %v746
  %v748 = vpop.f32.mrf.mxu0
  %v749 = vadd.f32 %v660, %v748
  %750 = vmatmul.bf16.gmra.mxu0 %v98
  %v751 = vpop.f32.mrf.mxu0
  %v752 = vadd.f32 %v663, %v751
  %v753 = vpop.f32.mrf.mxu0
  %v754 = vadd.f32 %v665, %v753
  %755 = vmatmul.bf16.gmra.mxu0 %v100
  %v756 = vpop.f32.mrf.mxu0
  %v757 = vadd.f32 %v668, %v756
  %v758 = vpop.f32.mrf.mxu0
  %v759 = vadd.f32 %v670, %v758
  %760 = vmatmul.bf16.gmra.mxu0 %v102
  %v761 = vpop.f32.mrf.mxu0
  %v762 = vadd.f32 %v673, %v761
  %v763 = vpop.f32.mrf.mxu0
  %v764 = vadd.f32 %v675, %v763
  %765 = vmatmul.bf16.gmra.mxu0 %v104
  %v766 = vpop.f32.mrf.mxu0
  %v767 = vadd.f32 %v678, %v766
  %v768 = vpop.f32.mrf.mxu0
  %v769 = vadd.f32 %v680, %v768
  %770 = vmatmul.bf16.gmra.mxu0 %v106
  %v771 = vpop.f32.mrf.mxu0
  %v772 = vadd.f32 %v683, %v771
  %v773 = vpop.f32.mrf.mxu0
  %v774 = vadd.f32 %v685, %v773
  %775 = vmatmul.bf16.gmra.mxu0 %v108
  %v776 = vpop.f32.mrf.mxu0
  %v777 = vadd.f32 %v688, %v776
  %v778 = vpop.f32.mrf.mxu0
  %v779 = vadd.f32 %v690, %v778
  %780 = vmatmul.bf16.gmra.mxu0 %v110
  %v781 = vpop.f32.mrf.mxu0
  %v782 = vadd.f32 %v693, %v781
  %v783 = vpop.f32.mrf.mxu0
  %v784 = vadd.f32 %v695, %v783
  %785 = vmatmul.bf16.gmra.mxu0 %v112
  %v786 = vpop.f32.mrf.mxu0
  %v787 = vadd.f32 %v698, %v786
  %v788 = vpop.f32.mrf.mxu0
  %v789 = vadd.f32 %v700, %v788
  %790 = vmatmul.bf16.gmra.mxu0 %v114
  %v791 = vpop.f32.mrf.mxu0
  %v792 = vadd.f32 %v703, %v791
  %v793 = vpop.f32.mrf.mxu0
  %v794 = vadd.f32 %v705, %v793
  %795 = vmatmul.bf16.gmra.mxu0 %v116
  %v796 = vpop.f32.mrf.mxu0
  %v797 = vadd.f32 %v708, %v796
  %v798 = vpop.f32.mrf.mxu0
  %v799 = vadd.f32 %v710, %v798
  %800 = vdwg.mxu0
  %801 = vmatpush.bf16.msra.mxu0 %v372
  %802 = vmatpush.bf16.msra.mxu0 %v369
  %803 = vmatpush.bf16.msra.mxu0 %v366
  %804 = vmatpush.bf16.msra.mxu0 %v363
  %805 = vmatpush.bf16.msra.mxu0 %v360
  %806 = vmatpush.bf16.msra.mxu0 %v357
  %807 = vmatpush.bf16.msra.mxu0 %v354
  %808 = vmatpush.bf16.msra.mxu0 %v351
  %809 = vmatmul.bf16.gmra.mxu0 %v85
  %v810 = vpop.f32.mrf.mxu0
  %v811 = vadd.f32 %v185, %v810
  %v812 = vpop.f32.mrf.mxu0
  %v813 = vadd.f32 %v185, %v812
  %814 = vmatmul.bf16.gmra.mxu0 %v87
  %v815 = vpop.f32.mrf.mxu0
  %v816 = vadd.f32 %v185, %v815
  %v817 = vpop.f32.mrf.mxu0
  %v818 = vadd.f32 %v185, %v817
  %819 = vmatmul.bf16.gmra.mxu0 %v89
  %v820 = vpop.f32.mrf.mxu0
  %v821 = vadd.f32 %v185, %v820
  %v822 = vpop.f32.mrf.mxu0
  %v823 = vadd.f32 %v185, %v822
  %824 = vmatmul.bf16.gmra.mxu0 %v91
  %v825 = vpop.f32.mrf.mxu0
  %v826 = vadd.f32 %v185, %v825
  %v827 = vpop.f32.mrf.mxu0
  %v828 = vadd.f32 %v185, %v827
  %829 = vmatmul.bf16.gmra.mxu0 %v93
  %v830 = vpop.f32.mrf.mxu0
  %v831 = vadd.f32 %v185, %v830
  %v832 = vpop.f32.mrf.mxu0
  %v833 = vadd.f32 %v185, %v832
  %834 = vmatmul.bf16.gmra.mxu0 %v95
  %v835 = vpop.f32.mrf.mxu0
  %v836 = vadd.f32 %v185, %v835
  %v837 = vpop.f32.mrf.mxu0
  %v838 = vadd.f32 %v185, %v837
  %839 = vmatmul.bf16.gmra.mxu0 %v97
  %v840 = vpop.f32.mrf.mxu0
  %v841 = vadd.f32 %v185, %v840
  %v842 = vpop.f32.mrf.mxu0
  %v843 = vadd.f32 %v185, %v842
  %844 = vmatmul.bf16.gmra.mxu0 %v99
  %v845 = vpop.f32.mrf.mxu0
  %v846 = vadd.f32 %v185, %v845
  %v847 = vpop.f32.mrf.mxu0
  %v848 = vadd.f32 %v185, %v847
  %849 = vmatmul.bf16.gmra.mxu0 %v101
  %v850 = vpop.f32.mrf.mxu0
  %v851 = vadd.f32 %v185, %v850
  %v852 = vpop.f32.mrf.mxu0
  %v853 = vadd.f32 %v185, %v852
  %854 = vmatmul.bf16.gmra.mxu0 %v103
  %v855 = vpop.f32.mrf.mxu0
  %v856 = vadd.f32 %v185, %v855
  %v857 = vpop.f32.mrf.mxu0
  %v858 = vadd.f32 %v185, %v857
  %859 = vmatmul.bf16.gmra.mxu0 %v105
  %v860 = vpop.f32.mrf.mxu0
  %v861 = vadd.f32 %v185, %v860
  %v862 = vpop.f32.mrf.mxu0
  %v863 = vadd.f32 %v185, %v862
  %864 = vmatmul.bf16.gmra.mxu0 %v107
  %v865 = vpop.f32.mrf.mxu0
  %v866 = vadd.f32 %v185, %v865
  %v867 = vpop.f32.mrf.mxu0
  %v868 = vadd.f32 %v185, %v867
  %869 = vmatmul.bf16.gmra.mxu0 %v109
  %v870 = vpop.f32.mrf.mxu0
  %v871 = vadd.f32 %v185, %v870
  %v872 = vpop.f32.mrf.mxu0
  %v873 = vadd.f32 %v185, %v872
  %874 = vmatmul.bf16.gmra.mxu0 %v111
  %v875 = vpop.f32.mrf.mxu0
  %v876 = vadd.f32 %v185, %v875
  %v877 = vpop.f32.mrf.mxu0
  %v878 = vadd.f32 %v185, %v877
  %879 = vmatmul.bf16.gmra.mxu0 %v113
  %v880 = vpop.f32.mrf.mxu0
  %v881 = vadd.f32 %v185, %v880
  %v882 = vpop.f32.mrf.mxu0
  %v883 = vadd.f32 %v185, %v882
  %884 = vmatmul.bf16.gmra.mxu0 %v115
  %v885 = vpop.f32.mrf.mxu0
  %v886 = vadd.f32 %v185, %v885
  %v887 = vpop.f32.mrf.mxu0
  %v888 = vadd.f32 %v185, %v887
  %889 = vdwg.mxu0
  %890 = vmatpush.bf16.msra.mxu0 %v396
  %891 = vmatpush.bf16.msra.mxu0 %v393
  %892 = vmatpush.bf16.msra.mxu0 %v390
  %893 = vmatpush.bf16.msra.mxu0 %v387
  %894 = vmatpush.bf16.msra.mxu0 %v384
  %895 = vmatpush.bf16.msra.mxu0 %v381
  %896 = vmatpush.bf16.msra.mxu0 %v378
  %897 = vmatpush.bf16.msra.mxu0 %v375
  %898 = vmatmul.bf16.gmra.mxu0 %v86
  %v899 = vpop.f32.mrf.mxu0
  %v900 = vadd.f32 %v811, %v899
  %v901 = vpop.f32.mrf.mxu0
  %v902 = vadd.f32 %v813, %v901
  %903 = vmatmul.bf16.gmra.mxu0 %v88
  %v904 = vpop.f32.mrf.mxu0
  %v905 = vadd.f32 %v816, %v904
  %v906 = vpop.f32.mrf.mxu0
  %v907 = vadd.f32 %v818, %v906
  %908 = vmatmul.bf16.gmra.mxu0 %v90
  %v909 = vpop.f32.mrf.mxu0
  %v910 = vadd.f32 %v821, %v909
  %v911 = vpop.f32.mrf.mxu0
  %v912 = vadd.f32 %v823, %v911
  %913 = vmatmul.bf16.gmra.mxu0 %v92
  %v914 = vpop.f32.mrf.mxu0
  %v915 = vadd.f32 %v826, %v914
  %v916 = vpop.f32.mrf.mxu0
  %v917 = vadd.f32 %v828, %v916
  %918 = vmatmul.bf16.gmra.mxu0 %v94
  %v919 = vpop.f32.mrf.mxu0
  %v920 = vadd.f32 %v831, %v919
  %v921 = vpop.f32.mrf.mxu0
  %v922 = vadd.f32 %v833, %v921
  %923 = vmatmul.bf16.gmra.mxu0 %v96
  %v924 = vpop.f32.mrf.mxu0
  %v925 = vadd.f32 %v836, %v924
  %v926 = vpop.f32.mrf.mxu0
  %v927 = vadd.f32 %v838, %v926
  %928 = vmatmul.bf16.gmra.mxu0 %v98
  %v929 = vpop.f32.mrf.mxu0
  %v930 = vadd.f32 %v841, %v929
  %v931 = vpop.f32.mrf.mxu0
  %v932 = vadd.f32 %v843, %v931
  %933 = vmatmul.bf16.gmra.mxu0 %v100
  %v934 = vpop.f32.mrf.mxu0
  %v935 = vadd.f32 %v846, %v934
  %v936 = vpop.f32.mrf.mxu0
  %v937 = vadd.f32 %v848, %v936
  %938 = vmatmul.bf16.gmra.mxu0 %v102
  %v939 = vpop.f32.mrf.mxu0
  %v940 = vadd.f32 %v851, %v939
  %v941 = vpop.f32.mrf.mxu0
  %v942 = vadd.f32 %v853, %v941
  %943 = vmatmul.bf16.gmra.mxu0 %v104
  %v944 = vpop.f32.mrf.mxu0
  %v945 = vadd.f32 %v856, %v944
  %v946 = vpop.f32.mrf.mxu0
  %v947 = vadd.f32 %v858, %v946
  %948 = vmatmul.bf16.gmra.mxu0 %v106
  %v949 = vpop.f32.mrf.mxu0
  %v950 = vadd.f32 %v861, %v949
  %v951 = vpop.f32.mrf.mxu0
  %v952 = vadd.f32 %v863, %v951
  %953 = vmatmul.bf16.gmra.mxu0 %v108
  %v954 = vpop.f32.mrf.mxu0
  %v955 = vadd.f32 %v866, %v954
  %v956 = vpop.f32.mrf.mxu0
  %v957 = vadd.f32 %v868, %v956
  %958 = vmatmul.bf16.gmra.mxu0 %v110
  %v959 = vpop.f32.mrf.mxu0
  %v960 = vadd.f32 %v871, %v959
  %v961 = vpop.f32.mrf.mxu0
  %v962 = vadd.f32 %v873, %v961
  %963 = vmatmul.bf16.gmra.mxu0 %v112
  %v964 = vpop.f32.mrf.mxu0
  %v965 = vadd.f32 %v876, %v964
  %v966 = vpop.f32.mrf.mxu0
  %v967 = vadd.f32 %v878, %v966
  %968 = vmatmul.bf16.gmra.mxu0 %v114
  %v969 = vpop.f32.mrf.mxu0
  %v970 = vadd.f32 %v881, %v969
  %v971 = vpop.f32.mrf.mxu0
  %v972 = vadd.f32 %v883, %v971
  %973 = vmatmul.bf16.gmra.mxu0 %v116
  %v974 = vpop.f32.mrf.mxu0
  %v975 = vadd.f32 %v886, %v974
  %v976 = vpop.f32.mrf.mxu0
  %v977 = vadd.f32 %v888, %v976
  %978 = vdwg.mxu0
  %v979 = vmax.f32 %v544, 0.0
  %v980 = vmax.f32 %v722, 0.0
  %v981 = vmax.f32 %v900, 0.0
  %v982 = vmax.f32 %v546, 0.0
  %v983 = vmax.f32 %v724, 0.0
  %v984 = vmax.f32 %v902, 0.0
  %v985 = vmax.f32 %v549, 0.0
  %v986 = vmax.f32 %v727, 0.0
  %v987 = vmax.f32 %v905, 0.0
  %v988 = vmax.f32 %v551, 0.0
  %v989 = vmax.f32 %v729, 0.0
  %v990 = vmax.f32 %v907, 0.0
  %v991 = vmax.f32 %v554, 0.0
  %v992 = vmax.f32 %v732, 0.0
  %v993 = vmax.f32 %v910, 0.0
  %v994 = vmax.f32 %v556, 0.0
  %v995 = vmax.f32 %v734, 0.0
  %v996 = vmax.f32 %v912, 0.0
  %v997 = vmax.f32 %v559, 0.0
  %v998 = vmax.f32 %v737, 0.0
  %v999 = vmax.f32 %v915, 0.0
  %v1000 = vmax.f32 %v561, 0.0
  %v1001 = vmax.f32 %v739, 0.0
  %v1002 = vmax.f32 %v917, 0.0
  %v1003 = vmax.f32 %v564, 0.0
  %v1004 = vmax.f32 %v742, 0.0
  %v1005 = vmax.f32 %v920, 0.0
  %v1006 = vmax.f32 %v566, 0.0
  %v1007 = vmax.f32 %v744, 0.0
  %v1008 = vmax.f32 %v922, 0.0
  %v1009 = vmax.f32 %v569, 0.0
  %v1010 = vmax.f32 %v747, 0.0
  %v1011 = vmax.f32 %v925, 0.0
  %v1012 = vmax.f32 %v571, 0.0
  %v1013 = vmax.f32 %v749, 0.0
  %v1014 = vmax.f32 %v927, 0.0
  %v1015 = vmax.f32 %v574, 0.0
  %v1016 = vmax.f32 %v752, 0.0
  %v1017 = vmax.f32 %v930, 0.0
  %v1018 = vmax.f32 %v576, 0.0
  %v1019 = vmax.f32 %v754, 0.0
  %v1020 = vmax.f32 %v932, 0.0
  %v1021 = vmax.f32 %v579, 0.0
  %v1022 = vmax.f32 %v757, 0.0
  %v1023 = vmax.f32 %v935, 0.0
  %v1024 = vmax.f32 %v581, 0.0
  %v1025 = vmax.f32 %v759, 0.0
  %v1026 = vmax.f32 %v937, 0.0
  %v1027 = vmax.f32 %v584, 0.0
  %v1028 = vmax.f32 %v762, 0.0
  %v1029 = vmax.f32 %v940, 0.0
  %v1030 = vmax.f32 %v586, 0.0
  %v1031 = vmax.f32 %v764, 0.0
  %v1032 = vmax.f32 %v942, 0.0
  %v1033 = vmax.f32 %v589, 0.0
  %v1034 = vmax.f32 %v767, 0.0
  %v1035 = vmax.f32 %v945, 0.0
  %v1036 = vmax.f32 %v591, 0.0
  %v1037 = vmax.f32 %v769, 0.0
  %v1038 = vmax.f32 %v947, 0.0
  %v1039 = vmax.f32 %v594, 0.0
  %v1040 = vmax.f32 %v772, 0.0
  %v1041 = vmax.f32 %v950, 0.0
  %v1042 = vmax.f32 %v596, 0.0
  %v1043 = vmax.f32 %v774, 0.0
  %v1044 = vmax.f32 %v952, 0.0
  %v1045 = vmax.f32 %v599, 0.0
  %v1046 = vmax.f32 %v777, 0.0
  %v1047 = vmax.f32 %v955, 0.0
  %v1048 = vmax.f32 %v601, 0.0
  %v1049 = vmax.f32 %v779, 0.0
  %v1050 = vmax.f32 %v957, 0.0
  %v1051 = vmax.f32 %v604, 0.0
  %v1052 = vmax.f32 %v782, 0.0
  %v1053 = vmax.f32 %v960, 0.0
  %v1054 = vmax.f32 %v606, 0.0
  %v1055 = vmax.f32 %v784, 0.0
  %v1056 = vmax.f32 %v962, 0.0
  %v1057 = vmax.f32 %v609, 0.0
  %v1058 = vmax.f32 %v787, 0.0
  %v1059 = vmax.f32 %v965, 0.0
  %v1060 = vmax.f32 %v611, 0.0
  %v1061 = vmax.f32 %v789, 0.0
  %v1062 = vmax.f32 %v967, 0.0
  %v1063 = vmax.f32 %v614, 0.0
  %v1064 = vmax.f32 %v792, 0.0
  %v1065 = vmax.f32 %v970, 0.0
  %v1066 = vmax.f32 %v616, 0.0
  %v1067 = vmax.f32 %v794, 0.0
  %v1068 = vmax.f32 %v972, 0.0
  %v1069 = vmax.f32 %v619, 0.0
  %v1070 = vmax.f32 %v797, 0.0
  %v1071 = vmax.f32 %v975, 0.0
  %v1072 = vmax.f32 %v621, 0.0
  %v1073 = vmax.f32 %v799, 0.0
  %v1074 = vmax.f32 %v977, 0.0
  %v1075 = vld [vmem:[%s3] sm:$0x7]
  %v1077 = vperm.slane %v1075, 0
  %v1078 = vperm.slane %v1075, 1
  %v1079 = vperm.slane %v1075, 2
  %v1083 = vmul.f32 %v979, %v1077
  %v1084 = vmul.f32 %v980, %v1078
  %v1085 = vmul.f32 %v981, %v1079
  %v1086 = vmul.f32 %v982, %v1077
  %v1087 = vmul.f32 %v983, %v1078
  %v1088 = vmul.f32 %v984, %v1079
  %v1089 = vmul.f32 %v985, %v1077
  %v1090 = vmul.f32 %v986, %v1078
  %v1091 = vmul.f32 %v987, %v1079
  %v1092 = vmul.f32 %v988, %v1077
  %v1093 = vmul.f32 %v989, %v1078
  %v1094 = vmul.f32 %v990, %v1079
  %v1095 = vmul.f32 %v991, %v1077
  %v1096 = vmul.f32 %v992, %v1078
  %v1097 = vmul.f32 %v993, %v1079
  %v1098 = vmul.f32 %v994, %v1077
  %v1099 = vmul.f32 %v995, %v1078
  %v1100 = vmul.f32 %v996, %v1079
  %v1101 = vmul.f32 %v997, %v1077
  %v1102 = vmul.f32 %v998, %v1078
  %v1103 = vmul.f32 %v999, %v1079
  %v1104 = vmul.f32 %v1000, %v1077
  %v1105 = vmul.f32 %v1001, %v1078
  %v1106 = vmul.f32 %v1002, %v1079
  %v1107 = vmul.f32 %v1003, %v1077
  %v1108 = vmul.f32 %v1004, %v1078
  %v1109 = vmul.f32 %v1005, %v1079
  %v1110 = vmul.f32 %v1006, %v1077
  %v1111 = vmul.f32 %v1007, %v1078
  %v1112 = vmul.f32 %v1008, %v1079
  %v1113 = vmul.f32 %v1009, %v1077
  %v1114 = vmul.f32 %v1010, %v1078
  %v1115 = vmul.f32 %v1011, %v1079
  %v1116 = vmul.f32 %v1012, %v1077
  %v1117 = vmul.f32 %v1013, %v1078
  %v1118 = vmul.f32 %v1014, %v1079
  %v1119 = vmul.f32 %v1015, %v1077
  %v1120 = vmul.f32 %v1016, %v1078
  %v1121 = vmul.f32 %v1017, %v1079
  %v1122 = vmul.f32 %v1018, %v1077
  %v1123 = vmul.f32 %v1019, %v1078
  %v1124 = vmul.f32 %v1020, %v1079
  %v1125 = vmul.f32 %v1021, %v1077
  %v1126 = vmul.f32 %v1022, %v1078
  %v1127 = vmul.f32 %v1023, %v1079
  %v1128 = vmul.f32 %v1024, %v1077
  %v1129 = vmul.f32 %v1025, %v1078
  %v1130 = vmul.f32 %v1026, %v1079
  %v1131 = vmul.f32 %v1027, %v1077
  %v1132 = vmul.f32 %v1028, %v1078
  %v1133 = vmul.f32 %v1029, %v1079
  %v1134 = vmul.f32 %v1030, %v1077
  %v1135 = vmul.f32 %v1031, %v1078
  %v1136 = vmul.f32 %v1032, %v1079
  %v1137 = vmul.f32 %v1033, %v1077
  %v1138 = vmul.f32 %v1034, %v1078
  %v1139 = vmul.f32 %v1035, %v1079
  %v1140 = vmul.f32 %v1036, %v1077
  %v1141 = vmul.f32 %v1037, %v1078
  %v1142 = vmul.f32 %v1038, %v1079
  %v1143 = vmul.f32 %v1039, %v1077
  %v1144 = vmul.f32 %v1040, %v1078
  %v1145 = vmul.f32 %v1041, %v1079
  %v1146 = vmul.f32 %v1042, %v1077
  %v1147 = vmul.f32 %v1043, %v1078
  %v1148 = vmul.f32 %v1044, %v1079
  %v1149 = vmul.f32 %v1045, %v1077
  %v1150 = vmul.f32 %v1046, %v1078
  %v1151 = vmul.f32 %v1047, %v1079
  %v1152 = vmul.f32 %v1048, %v1077
  %v1153 = vmul.f32 %v1049, %v1078
  %v1154 = vmul.f32 %v1050, %v1079
  %v1155 = vmul.f32 %v1051, %v1077
  %v1156 = vmul.f32 %v1052, %v1078
  %v1157 = vmul.f32 %v1053, %v1079
  %v1158 = vmul.f32 %v1054, %v1077
  %v1159 = vmul.f32 %v1055, %v1078
  %v1160 = vmul.f32 %v1056, %v1079
  %v1161 = vmul.f32 %v1057, %v1077
  %v1162 = vmul.f32 %v1058, %v1078
  %v1163 = vmul.f32 %v1059, %v1079
  %v1164 = vmul.f32 %v1060, %v1077
  %v1165 = vmul.f32 %v1061, %v1078
  %v1166 = vmul.f32 %v1062, %v1079
  %v1167 = vmul.f32 %v1063, %v1077
  %v1168 = vmul.f32 %v1064, %v1078
  %v1169 = vmul.f32 %v1065, %v1079
  %v1170 = vmul.f32 %v1066, %v1077
  %v1171 = vmul.f32 %v1067, %v1078
  %v1172 = vmul.f32 %v1068, %v1079
  %v1173 = vmul.f32 %v1069, %v1077
  %v1174 = vmul.f32 %v1070, %v1078
  %v1175 = vmul.f32 %v1071, %v1079
  %v1176 = vmul.f32 %v1072, %v1077
  %v1177 = vmul.f32 %v1073, %v1078
  %v1178 = vmul.f32 %v1074, %v1079
  %v1179 = vadd.f32 %v1083, %v1084
  %vm1180 = vcmask 523264
  %v1181 = vsel %vm1180, %v1085, 0.0
  %v1182 = vadd.f32 %v1179, %v1181
  %1183 = vadd.xlane.f32.xlu0 %v1182
  %v1184 = vpop.xlane.xlu0 %1183
  %v1185 = vadd.f32 %v1086, %v1087
  %v1186 = vsel %vm1180, %v1088, 0.0
  %v1187 = vadd.f32 %v1185, %v1186
  %1188 = vadd.xlane.f32.xlu0 %v1187
  %v1189 = vpop.xlane.xlu0 %1188
  %v1190 = vadd.f32 %v1089, %v1090
  %v1191 = vsel %vm1180, %v1091, 0.0
  %v1192 = vadd.f32 %v1190, %v1191
  %1193 = vadd.xlane.f32.xlu0 %v1192
  %v1194 = vpop.xlane.xlu0 %1193
  %v1195 = vadd.f32 %v1092, %v1093
  %v1196 = vsel %vm1180, %v1094, 0.0
  %v1197 = vadd.f32 %v1195, %v1196
  %1198 = vadd.xlane.f32.xlu0 %v1197
  %v1199 = vpop.xlane.xlu0 %1198
  %v1200 = vadd.f32 %v1095, %v1096
  %v1201 = vsel %vm1180, %v1097, 0.0
  %v1202 = vadd.f32 %v1200, %v1201
  %1203 = vadd.xlane.f32.xlu0 %v1202
  %v1204 = vpop.xlane.xlu0 %1203
  %v1205 = vadd.f32 %v1098, %v1099
  %v1206 = vsel %vm1180, %v1100, 0.0
  %v1207 = vadd.f32 %v1205, %v1206
  %1208 = vadd.xlane.f32.xlu0 %v1207
  %v1209 = vpop.xlane.xlu0 %1208
  %v1210 = vadd.f32 %v1101, %v1102
  %v1211 = vsel %vm1180, %v1103, 0.0
  %v1212 = vadd.f32 %v1210, %v1211
  %1213 = vadd.xlane.f32.xlu0 %v1212
  %v1214 = vpop.xlane.xlu0 %1213
  %v1215 = vadd.f32 %v1104, %v1105
  %v1216 = vsel %vm1180, %v1106, 0.0
  %v1217 = vadd.f32 %v1215, %v1216
  %1218 = vadd.xlane.f32.xlu0 %v1217
  %v1219 = vpop.xlane.xlu0 %1218
  %v1220 = vadd.f32 %v1107, %v1108
  %v1221 = vsel %vm1180, %v1109, 0.0
  %v1222 = vadd.f32 %v1220, %v1221
  %1223 = vadd.xlane.f32.xlu0 %v1222
  %v1224 = vpop.xlane.xlu0 %1223
  %v1225 = vadd.f32 %v1110, %v1111
  %v1226 = vsel %vm1180, %v1112, 0.0
  %v1227 = vadd.f32 %v1225, %v1226
  %1228 = vadd.xlane.f32.xlu0 %v1227
  %v1229 = vpop.xlane.xlu0 %1228
  %v1230 = vadd.f32 %v1113, %v1114
  %v1231 = vsel %vm1180, %v1115, 0.0
  %v1232 = vadd.f32 %v1230, %v1231
  %1233 = vadd.xlane.f32.xlu0 %v1232
  %v1234 = vpop.xlane.xlu0 %1233
  %v1235 = vadd.f32 %v1116, %v1117
  %v1236 = vsel %vm1180, %v1118, 0.0
  %v1237 = vadd.f32 %v1235, %v1236
  %1238 = vadd.xlane.f32.xlu0 %v1237
  %v1239 = vpop.xlane.xlu0 %1238
  %v1240 = vadd.f32 %v1119, %v1120
  %v1241 = vsel %vm1180, %v1121, 0.0
  %v1242 = vadd.f32 %v1240, %v1241
  %1243 = vadd.xlane.f32.xlu0 %v1242
  %v1244 = vpop.xlane.xlu0 %1243
  %v1245 = vadd.f32 %v1122, %v1123
  %v1246 = vsel %vm1180, %v1124, 0.0
  %v1247 = vadd.f32 %v1245, %v1246
  %1248 = vadd.xlane.f32.xlu0 %v1247
  %v1249 = vpop.xlane.xlu0 %1248
  %v1250 = vadd.f32 %v1125, %v1126
  %v1251 = vsel %vm1180, %v1127, 0.0
  %v1252 = vadd.f32 %v1250, %v1251
  %1253 = vadd.xlane.f32.xlu0 %v1252
  %v1254 = vpop.xlane.xlu0 %1253
  %v1255 = vadd.f32 %v1128, %v1129
  %v1256 = vsel %vm1180, %v1130, 0.0
  %v1257 = vadd.f32 %v1255, %v1256
  %1258 = vadd.xlane.f32.xlu0 %v1257
  %v1259 = vpop.xlane.xlu0 %1258
  %v1260 = vadd.f32 %v1131, %v1132
  %v1261 = vsel %vm1180, %v1133, 0.0
  %v1262 = vadd.f32 %v1260, %v1261
  %1263 = vadd.xlane.f32.xlu0 %v1262
  %v1264 = vpop.xlane.xlu0 %1263
  %v1265 = vadd.f32 %v1134, %v1135
  %v1266 = vsel %vm1180, %v1136, 0.0
  %v1267 = vadd.f32 %v1265, %v1266
  %1268 = vadd.xlane.f32.xlu0 %v1267
  %v1269 = vpop.xlane.xlu0 %1268
  %v1270 = vadd.f32 %v1137, %v1138
  %v1271 = vsel %vm1180, %v1139, 0.0
  %v1272 = vadd.f32 %v1270, %v1271
  %1273 = vadd.xlane.f32.xlu0 %v1272
  %v1274 = vpop.xlane.xlu0 %1273
  %v1275 = vadd.f32 %v1140, %v1141
  %v1276 = vsel %vm1180, %v1142, 0.0
  %v1277 = vadd.f32 %v1275, %v1276
  %1278 = vadd.xlane.f32.xlu0 %v1277
  %v1279 = vpop.xlane.xlu0 %1278
  %v1280 = vadd.f32 %v1143, %v1144
  %v1281 = vsel %vm1180, %v1145, 0.0
  %v1282 = vadd.f32 %v1280, %v1281
  %1283 = vadd.xlane.f32.xlu0 %v1282
  %v1284 = vpop.xlane.xlu0 %1283
  %v1285 = vadd.f32 %v1146, %v1147
  %v1286 = vsel %vm1180, %v1148, 0.0
  %v1287 = vadd.f32 %v1285, %v1286
  %1288 = vadd.xlane.f32.xlu0 %v1287
  %v1289 = vpop.xlane.xlu0 %1288
  %v1290 = vadd.f32 %v1149, %v1150
  %v1291 = vsel %vm1180, %v1151, 0.0
  %v1292 = vadd.f32 %v1290, %v1291
  %1293 = vadd.xlane.f32.xlu0 %v1292
  %v1294 = vpop.xlane.xlu0 %1293
  %v1295 = vadd.f32 %v1152, %v1153
  %v1296 = vsel %vm1180, %v1154, 0.0
  %v1297 = vadd.f32 %v1295, %v1296
  %1298 = vadd.xlane.f32.xlu0 %v1297
  %v1299 = vpop.xlane.xlu0 %1298
  %v1300 = vadd.f32 %v1155, %v1156
  %v1301 = vsel %vm1180, %v1157, 0.0
  %v1302 = vadd.f32 %v1300, %v1301
  %1303 = vadd.xlane.f32.xlu0 %v1302
  %v1304 = vpop.xlane.xlu0 %1303
  %v1305 = vadd.f32 %v1158, %v1159
  %v1306 = vsel %vm1180, %v1160, 0.0
  %v1307 = vadd.f32 %v1305, %v1306
  %1308 = vadd.xlane.f32.xlu0 %v1307
  %v1309 = vpop.xlane.xlu0 %1308
  %v1310 = vadd.f32 %v1161, %v1162
  %v1311 = vsel %vm1180, %v1163, 0.0
  %v1312 = vadd.f32 %v1310, %v1311
  %1313 = vadd.xlane.f32.xlu0 %v1312
  %v1314 = vpop.xlane.xlu0 %1313
  %v1315 = vadd.f32 %v1164, %v1165
  %v1316 = vsel %vm1180, %v1166, 0.0
  %v1317 = vadd.f32 %v1315, %v1316
  %1318 = vadd.xlane.f32.xlu0 %v1317
  %v1319 = vpop.xlane.xlu0 %1318
  %v1320 = vadd.f32 %v1167, %v1168
  %v1321 = vsel %vm1180, %v1169, 0.0
  %v1322 = vadd.f32 %v1320, %v1321
  %1323 = vadd.xlane.f32.xlu0 %v1322
  %v1324 = vpop.xlane.xlu0 %1323
  %v1325 = vadd.f32 %v1170, %v1171
  %v1326 = vsel %vm1180, %v1172, 0.0
  %v1327 = vadd.f32 %v1325, %v1326
  %1328 = vadd.xlane.f32.xlu0 %v1327
  %v1329 = vpop.xlane.xlu0 %1328
  %v1330 = vadd.f32 %v1173, %v1174
  %v1331 = vsel %vm1180, %v1175, 0.0
  %v1332 = vadd.f32 %v1330, %v1331
  %1333 = vadd.xlane.f32.xlu0 %v1332
  %v1334 = vpop.xlane.xlu0 %1333
  %v1335 = vadd.f32 %v1176, %v1177
  %v1336 = vsel %vm1180, %v1178, 0.0
  %v1337 = vadd.f32 %v1335, %v1336
  %1338 = vadd.xlane.f32.xlu0 %v1337
  %v1339 = vpop.xlane.xlu0 %1338
  %s1340 = sld [smem:[#allocation2]]
  %v1341 = vstv %s1340
  %v1342 = vadd.f32 %v1184, %v1341
  %v1343 = vadd.f32 %v1189, %v1341
  %v1344 = vadd.f32 %v1194, %v1341
  %v1345 = vadd.f32 %v1199, %v1341
  %v1346 = vadd.f32 %v1204, %v1341
  %v1347 = vadd.f32 %v1209, %v1341
  %v1348 = vadd.f32 %v1214, %v1341
  %v1349 = vadd.f32 %v1219, %v1341
  %v1350 = vadd.f32 %v1224, %v1341
  %v1351 = vadd.f32 %v1229, %v1341
  %v1352 = vadd.f32 %v1234, %v1341
  %v1353 = vadd.f32 %v1239, %v1341
  %v1354 = vadd.f32 %v1244, %v1341
  %v1355 = vadd.f32 %v1249, %v1341
  %v1356 = vadd.f32 %v1254, %v1341
  %v1357 = vadd.f32 %v1259, %v1341
  %v1358 = vadd.f32 %v1264, %v1341
  %v1359 = vadd.f32 %v1269, %v1341
  %v1360 = vadd.f32 %v1274, %v1341
  %v1361 = vadd.f32 %v1279, %v1341
  %v1362 = vadd.f32 %v1284, %v1341
  %v1363 = vadd.f32 %v1289, %v1341
  %v1364 = vadd.f32 %v1294, %v1341
  %v1365 = vadd.f32 %v1299, %v1341
  %v1366 = vadd.f32 %v1304, %v1341
  %v1367 = vadd.f32 %v1309, %v1341
  %v1368 = vadd.f32 %v1314, %v1341
  %v1369 = vadd.f32 %v1319, %v1341
  %v1370 = vadd.f32 %v1324, %v1341
  %v1371 = vadd.f32 %v1329, %v1341
  %v1372 = vadd.f32 %v1334, %v1341
  %v1373 = vadd.f32 %v1339, %v1341
  %v1374 = vsub.f32 0.0, %v1342
  %v1375 = vsub.f32 0.0, %v1343
  %v1376 = vsub.f32 0.0, %v1344
  %v1377 = vsub.f32 0.0, %v1345
  %v1378 = vsub.f32 0.0, %v1346
  %v1379 = vsub.f32 0.0, %v1347
  %v1380 = vsub.f32 0.0, %v1348
  %v1381 = vsub.f32 0.0, %v1349
  %v1382 = vsub.f32 0.0, %v1350
  %v1383 = vsub.f32 0.0, %v1351
  %v1384 = vsub.f32 0.0, %v1352
  %v1385 = vsub.f32 0.0, %v1353
  %v1386 = vsub.f32 0.0, %v1354
  %v1387 = vsub.f32 0.0, %v1355
  %v1388 = vsub.f32 0.0, %v1356
  %v1389 = vsub.f32 0.0, %v1357
  %v1390 = vsub.f32 0.0, %v1358
  %v1391 = vsub.f32 0.0, %v1359
  %v1392 = vsub.f32 0.0, %v1360
  %v1393 = vsub.f32 0.0, %v1361
  %v1394 = vsub.f32 0.0, %v1362
  %v1395 = vsub.f32 0.0, %v1363
  %v1396 = vsub.f32 0.0, %v1364
  %v1397 = vsub.f32 0.0, %v1365
  %v1398 = vsub.f32 0.0, %v1366
  %v1399 = vsub.f32 0.0, %v1367
  %v1400 = vsub.f32 0.0, %v1368
  %v1401 = vsub.f32 0.0, %v1369
  %v1402 = vsub.f32 0.0, %v1370
  %v1403 = vsub.f32 0.0, %v1371
  %v1404 = vsub.f32 0.0, %v1372
  %v1405 = vsub.f32 0.0, %v1373
  %v1406 = vmul.f32 %v1374, 1.442695
  %v1407 = vpow.pop %v1406
  %v1408 = vmul.f32 %v1375, 1.442695
  %v1409 = vpow.pop %v1408
  %v1410 = vmul.f32 %v1376, 1.442695
  %v1411 = vpow.pop %v1410
  %v1412 = vmul.f32 %v1377, 1.442695
  %v1413 = vpow.pop %v1412
  %v1414 = vmul.f32 %v1378, 1.442695
  %v1415 = vpow.pop %v1414
  %v1416 = vmul.f32 %v1379, 1.442695
  %v1417 = vpow.pop %v1416
  %v1418 = vmul.f32 %v1380, 1.442695
  %v1419 = vpow.pop %v1418
  %v1420 = vmul.f32 %v1381, 1.442695
  %v1421 = vpow.pop %v1420
  %v1422 = vmul.f32 %v1382, 1.442695
  %v1423 = vpow.pop %v1422
  %v1424 = vmul.f32 %v1383, 1.442695
  %v1425 = vpow.pop %v1424
  %v1426 = vmul.f32 %v1384, 1.442695
  %v1427 = vpow.pop %v1426
  %v1428 = vmul.f32 %v1385, 1.442695
  %v1429 = vpow.pop %v1428
  %v1430 = vmul.f32 %v1386, 1.442695
  %v1431 = vpow.pop %v1430
  %v1432 = vmul.f32 %v1387, 1.442695
  %v1433 = vpow.pop %v1432
  %v1434 = vmul.f32 %v1388, 1.442695
  %v1435 = vpow.pop %v1434
  %v1436 = vmul.f32 %v1389, 1.442695
  %v1437 = vpow.pop %v1436
  %v1438 = vmul.f32 %v1390, 1.442695
  %v1439 = vpow.pop %v1438
  %v1440 = vmul.f32 %v1391, 1.442695
  %v1441 = vpow.pop %v1440
  %v1442 = vmul.f32 %v1392, 1.442695
  %v1443 = vpow.pop %v1442
  %v1444 = vmul.f32 %v1393, 1.442695
  %v1445 = vpow.pop %v1444
  %v1446 = vmul.f32 %v1394, 1.442695
  %v1447 = vpow.pop %v1446
  %v1448 = vmul.f32 %v1395, 1.442695
  %v1449 = vpow.pop %v1448
  %v1450 = vmul.f32 %v1396, 1.442695
  %v1451 = vpow.pop %v1450
  %v1452 = vmul.f32 %v1397, 1.442695
  %v1453 = vpow.pop %v1452
  %v1454 = vmul.f32 %v1398, 1.442695
  %v1455 = vpow.pop %v1454
  %v1456 = vmul.f32 %v1399, 1.442695
  %v1457 = vpow.pop %v1456
  %v1458 = vmul.f32 %v1400, 1.442695
  %v1459 = vpow.pop %v1458
  %v1460 = vmul.f32 %v1401, 1.442695
  %v1461 = vpow.pop %v1460
  %v1462 = vmul.f32 %v1402, 1.442695
  %v1463 = vpow.pop %v1462
  %v1464 = vmul.f32 %v1403, 1.442695
  %v1465 = vpow.pop %v1464
  %v1466 = vmul.f32 %v1404, 1.442695
  %v1467 = vpow.pop %v1466
  %v1468 = vmul.f32 %v1405, 1.442695
  %v1469 = vpow.pop %v1468
  %v1470 = vadd.f32 %v1407, 1.0
  %v1471 = vadd.f32 %v1409, 1.0
  %v1472 = vadd.f32 %v1411, 1.0
  %v1473 = vadd.f32 %v1413, 1.0
  %v1474 = vadd.f32 %v1415, 1.0
  %v1475 = vadd.f32 %v1417, 1.0
  %v1476 = vadd.f32 %v1419, 1.0
  %v1477 = vadd.f32 %v1421, 1.0
  %v1478 = vadd.f32 %v1423, 1.0
  %v1479 = vadd.f32 %v1425, 1.0
  %v1480 = vadd.f32 %v1427, 1.0
  %v1481 = vadd.f32 %v1429, 1.0
  %v1482 = vadd.f32 %v1431, 1.0
  %v1483 = vadd.f32 %v1433, 1.0
  %v1484 = vadd.f32 %v1435, 1.0
  %v1485 = vadd.f32 %v1437, 1.0
  %v1486 = vadd.f32 %v1439, 1.0
  %v1487 = vadd.f32 %v1441, 1.0
  %v1488 = vadd.f32 %v1443, 1.0
  %v1489 = vadd.f32 %v1445, 1.0
  %v1490 = vadd.f32 %v1447, 1.0
  %v1491 = vadd.f32 %v1449, 1.0
  %v1492 = vadd.f32 %v1451, 1.0
  %v1493 = vadd.f32 %v1453, 1.0
  %v1494 = vadd.f32 %v1455, 1.0
  %v1495 = vadd.f32 %v1457, 1.0
  %v1496 = vadd.f32 %v1459, 1.0
  %v1497 = vadd.f32 %v1461, 1.0
  %v1498 = vadd.f32 %v1463, 1.0
  %v1499 = vadd.f32 %v1465, 1.0
  %v1500 = vadd.f32 %v1467, 1.0
  %v1501 = vadd.f32 %v1469, 1.0
  %v1502 = vrcp.pop %v1470
  %v1503 = vmul.f32 %v1470, %v1502
  %v1504 = vsub.f32 1.0, %v1503
  %v1505 = vmul.f32 %v1502, %v1504
  %v1506 = vadd.f32 %v1502, %v1505
  %vm1507 = vweird.f32 %v1470
  %vm1508 = vweird.f32 %v1502
  %vm1509 = vmor %vm1507, %vm1508
  %v1510 = vsel %vm1509, %v1502, %v1506
  %v1511 = vand.u32 2147483647, %v1470
  %vm1512 = vcmp.eq.f32.partialorder %v1511, 8.507059e+37
  %v1513 = vand.u32 %v1470, 2147483648
  %v1514 = vor.u32 1.1754944e-38, %v1513
  %v1515 = vsel %vm1512, %v1514, %v1510
  %v1516 = vmul.f32 1.0, %v1515
  %v1517 = vrcp.pop %v1471
  %v1518 = vmul.f32 %v1471, %v1517
  %v1519 = vsub.f32 1.0, %v1518
  %v1520 = vmul.f32 %v1517, %v1519
  %v1521 = vadd.f32 %v1517, %v1520
  %vm1522 = vweird.f32 %v1471
  %vm1523 = vweird.f32 %v1517
  %vm1524 = vmor %vm1522, %vm1523
  %v1525 = vsel %vm1524, %v1517, %v1521
  %v1526 = vand.u32 2147483647, %v1471
  %vm1527 = vcmp.eq.f32.partialorder %v1526, 8.507059e+37
  %v1528 = vand.u32 %v1471, 2147483648
  %v1529 = vor.u32 1.1754944e-38, %v1528
  %v1530 = vsel %vm1527, %v1529, %v1525
  %v1531 = vmul.f32 1.0, %v1530
  %v1532 = vrcp.pop %v1472
  %v1533 = vmul.f32 %v1472, %v1532
  %v1534 = vsub.f32 1.0, %v1533
  %v1535 = vmul.f32 %v1532, %v1534
  %v1536 = vadd.f32 %v1532, %v1535
  %vm1537 = vweird.f32 %v1472
  %vm1538 = vweird.f32 %v1532
  %vm1539 = vmor %vm1537, %vm1538
  %v1540 = vsel %vm1539, %v1532, %v1536
  %v1541 = vand.u32 2147483647, %v1472
  %vm1542 = vcmp.eq.f32.partialorder %v1541, 8.507059e+37
  %v1543 = vand.u32 %v1472, 2147483648
  %v1544 = vor.u32 1.1754944e-38, %v1543
  %v1545 = vsel %vm1542, %v1544, %v1540
  %v1546 = vmul.f32 1.0, %v1545
  %v1547 = vrcp.pop %v1473
  %v1548 = vmul.f32 %v1473, %v1547
  %v1549 = vsub.f32 1.0, %v1548
  %v1550 = vmul.f32 %v1547, %v1549
  %v1551 = vadd.f32 %v1547, %v1550
  %vm1552 = vweird.f32 %v1473
  %vm1553 = vweird.f32 %v1547
  %vm1554 = vmor %vm1552, %vm1553
  %v1555 = vsel %vm1554, %v1547, %v1551
  %v1556 = vand.u32 2147483647, %v1473
  %vm1557 = vcmp.eq.f32.partialorder %v1556, 8.507059e+37
  %v1558 = vand.u32 %v1473, 2147483648
  %v1559 = vor.u32 1.1754944e-38, %v1558
  %v1560 = vsel %vm1557, %v1559, %v1555
  %v1561 = vmul.f32 1.0, %v1560
  %v1562 = vrcp.pop %v1474
  %v1563 = vmul.f32 %v1474, %v1562
  %v1564 = vsub.f32 1.0, %v1563
  %v1565 = vmul.f32 %v1562, %v1564
  %v1566 = vadd.f32 %v1562, %v1565
  %vm1567 = vweird.f32 %v1474
  %vm1568 = vweird.f32 %v1562
  %vm1569 = vmor %vm1567, %vm1568
  %v1570 = vsel %vm1569, %v1562, %v1566
  %v1571 = vand.u32 2147483647, %v1474
  %vm1572 = vcmp.eq.f32.partialorder %v1571, 8.507059e+37
  %v1573 = vand.u32 %v1474, 2147483648
  %v1574 = vor.u32 1.1754944e-38, %v1573
  %v1575 = vsel %vm1572, %v1574, %v1570
  %v1576 = vmul.f32 1.0, %v1575
  %v1577 = vrcp.pop %v1475
  %v1578 = vmul.f32 %v1475, %v1577
  %v1579 = vsub.f32 1.0, %v1578
  %v1580 = vmul.f32 %v1577, %v1579
  %v1581 = vadd.f32 %v1577, %v1580
  %vm1582 = vweird.f32 %v1475
  %vm1583 = vweird.f32 %v1577
  %vm1584 = vmor %vm1582, %vm1583
  %v1585 = vsel %vm1584, %v1577, %v1581
  %v1586 = vand.u32 2147483647, %v1475
  %vm1587 = vcmp.eq.f32.partialorder %v1586, 8.507059e+37
  %v1588 = vand.u32 %v1475, 2147483648
  %v1589 = vor.u32 1.1754944e-38, %v1588
  %v1590 = vsel %vm1587, %v1589, %v1585
  %v1591 = vmul.f32 1.0, %v1590
  %v1592 = vrcp.pop %v1476
  %v1593 = vmul.f32 %v1476, %v1592
  %v1594 = vsub.f32 1.0, %v1593
  %v1595 = vmul.f32 %v1592, %v1594
  %v1596 = vadd.f32 %v1592, %v1595
  %vm1597 = vweird.f32 %v1476
  %vm1598 = vweird.f32 %v1592
  %vm1599 = vmor %vm1597, %vm1598
  %v1600 = vsel %vm1599, %v1592, %v1596
  %v1601 = vand.u32 2147483647, %v1476
  %vm1602 = vcmp.eq.f32.partialorder %v1601, 8.507059e+37
  %v1603 = vand.u32 %v1476, 2147483648
  %v1604 = vor.u32 1.1754944e-38, %v1603
  %v1605 = vsel %vm1602, %v1604, %v1600
  %v1606 = vmul.f32 1.0, %v1605
  %v1607 = vrcp.pop %v1477
  %v1608 = vmul.f32 %v1477, %v1607
  %v1609 = vsub.f32 1.0, %v1608
  %v1610 = vmul.f32 %v1607, %v1609
  %v1611 = vadd.f32 %v1607, %v1610
  %vm1612 = vweird.f32 %v1477
  %vm1613 = vweird.f32 %v1607
  %vm1614 = vmor %vm1612, %vm1613
  %v1615 = vsel %vm1614, %v1607, %v1611
  %v1616 = vand.u32 2147483647, %v1477
  %vm1617 = vcmp.eq.f32.partialorder %v1616, 8.507059e+37
  %v1618 = vand.u32 %v1477, 2147483648
  %v1619 = vor.u32 1.1754944e-38, %v1618
  %v1620 = vsel %vm1617, %v1619, %v1615
  %v1621 = vmul.f32 1.0, %v1620
  %v1622 = vrcp.pop %v1478
  %v1623 = vmul.f32 %v1478, %v1622
  %v1624 = vsub.f32 1.0, %v1623
  %v1625 = vmul.f32 %v1622, %v1624
  %v1626 = vadd.f32 %v1622, %v1625
  %vm1627 = vweird.f32 %v1478
  %vm1628 = vweird.f32 %v1622
  %vm1629 = vmor %vm1627, %vm1628
  %v1630 = vsel %vm1629, %v1622, %v1626
  %v1631 = vand.u32 2147483647, %v1478
  %vm1632 = vcmp.eq.f32.partialorder %v1631, 8.507059e+37
  %v1633 = vand.u32 %v1478, 2147483648
  %v1634 = vor.u32 1.1754944e-38, %v1633
  %v1635 = vsel %vm1632, %v1634, %v1630
  %v1636 = vmul.f32 1.0, %v1635
  %v1637 = vrcp.pop %v1479
  %v1638 = vmul.f32 %v1479, %v1637
  %v1639 = vsub.f32 1.0, %v1638
  %v1640 = vmul.f32 %v1637, %v1639
  %v1641 = vadd.f32 %v1637, %v1640
  %vm1642 = vweird.f32 %v1479
  %vm1643 = vweird.f32 %v1637
  %vm1644 = vmor %vm1642, %vm1643
  %v1645 = vsel %vm1644, %v1637, %v1641
  %v1646 = vand.u32 2147483647, %v1479
  %vm1647 = vcmp.eq.f32.partialorder %v1646, 8.507059e+37
  %v1648 = vand.u32 %v1479, 2147483648
  %v1649 = vor.u32 1.1754944e-38, %v1648
  %v1650 = vsel %vm1647, %v1649, %v1645
  %v1651 = vmul.f32 1.0, %v1650
  %v1652 = vrcp.pop %v1480
  %v1653 = vmul.f32 %v1480, %v1652
  %v1654 = vsub.f32 1.0, %v1653
  %v1655 = vmul.f32 %v1652, %v1654
  %v1656 = vadd.f32 %v1652, %v1655
  %vm1657 = vweird.f32 %v1480
  %vm1658 = vweird.f32 %v1652
  %vm1659 = vmor %vm1657, %vm1658
  %v1660 = vsel %vm1659, %v1652, %v1656
  %v1661 = vand.u32 2147483647, %v1480
  %vm1662 = vcmp.eq.f32.partialorder %v1661, 8.507059e+37
  %v1663 = vand.u32 %v1480, 2147483648
  %v1664 = vor.u32 1.1754944e-38, %v1663
  %v1665 = vsel %vm1662, %v1664, %v1660
  %v1666 = vmul.f32 1.0, %v1665
  %v1667 = vrcp.pop %v1481
  %v1668 = vmul.f32 %v1481, %v1667
  %v1669 = vsub.f32 1.0, %v1668
  %v1670 = vmul.f32 %v1667, %v1669
  %v1671 = vadd.f32 %v1667, %v1670
  %vm1672 = vweird.f32 %v1481
  %vm1673 = vweird.f32 %v1667
  %vm1674 = vmor %vm1672, %vm1673
  %v1675 = vsel %vm1674, %v1667, %v1671
  %v1676 = vand.u32 2147483647, %v1481
  %vm1677 = vcmp.eq.f32.partialorder %v1676, 8.507059e+37
  %v1678 = vand.u32 %v1481, 2147483648
  %v1679 = vor.u32 1.1754944e-38, %v1678
  %v1680 = vsel %vm1677, %v1679, %v1675
  %v1681 = vmul.f32 1.0, %v1680
  %v1682 = vrcp.pop %v1482
  %v1683 = vmul.f32 %v1482, %v1682
  %v1684 = vsub.f32 1.0, %v1683
  %v1685 = vmul.f32 %v1682, %v1684
  %v1686 = vadd.f32 %v1682, %v1685
  %vm1687 = vweird.f32 %v1482
  %vm1688 = vweird.f32 %v1682
  %vm1689 = vmor %vm1687, %vm1688
  %v1690 = vsel %vm1689, %v1682, %v1686
  %v1691 = vand.u32 2147483647, %v1482
  %vm1692 = vcmp.eq.f32.partialorder %v1691, 8.507059e+37
  %v1693 = vand.u32 %v1482, 2147483648
  %v1694 = vor.u32 1.1754944e-38, %v1693
  %v1695 = vsel %vm1692, %v1694, %v1690
  %v1696 = vmul.f32 1.0, %v1695
  %v1697 = vrcp.pop %v1483
  %v1698 = vmul.f32 %v1483, %v1697
  %v1699 = vsub.f32 1.0, %v1698
  %v1700 = vmul.f32 %v1697, %v1699
  %v1701 = vadd.f32 %v1697, %v1700
  %vm1702 = vweird.f32 %v1483
  %vm1703 = vweird.f32 %v1697
  %vm1704 = vmor %vm1702, %vm1703
  %v1705 = vsel %vm1704, %v1697, %v1701
  %v1706 = vand.u32 2147483647, %v1483
  %vm1707 = vcmp.eq.f32.partialorder %v1706, 8.507059e+37
  %v1708 = vand.u32 %v1483, 2147483648
  %v1709 = vor.u32 1.1754944e-38, %v1708
  %v1710 = vsel %vm1707, %v1709, %v1705
  %v1711 = vmul.f32 1.0, %v1710
  %v1712 = vrcp.pop %v1484
  %v1713 = vmul.f32 %v1484, %v1712
  %v1714 = vsub.f32 1.0, %v1713
  %v1715 = vmul.f32 %v1712, %v1714
  %v1716 = vadd.f32 %v1712, %v1715
  %vm1717 = vweird.f32 %v1484
  %vm1718 = vweird.f32 %v1712
  %vm1719 = vmor %vm1717, %vm1718
  %v1720 = vsel %vm1719, %v1712, %v1716
  %v1721 = vand.u32 2147483647, %v1484
  %vm1722 = vcmp.eq.f32.partialorder %v1721, 8.507059e+37
  %v1723 = vand.u32 %v1484, 2147483648
  %v1724 = vor.u32 1.1754944e-38, %v1723
  %v1725 = vsel %vm1722, %v1724, %v1720
  %v1726 = vmul.f32 1.0, %v1725
  %v1727 = vrcp.pop %v1485
  %v1728 = vmul.f32 %v1485, %v1727
  %v1729 = vsub.f32 1.0, %v1728
  %v1730 = vmul.f32 %v1727, %v1729
  %v1731 = vadd.f32 %v1727, %v1730
  %vm1732 = vweird.f32 %v1485
  %vm1733 = vweird.f32 %v1727
  %vm1734 = vmor %vm1732, %vm1733
  %v1735 = vsel %vm1734, %v1727, %v1731
  %v1736 = vand.u32 2147483647, %v1485
  %vm1737 = vcmp.eq.f32.partialorder %v1736, 8.507059e+37
  %v1738 = vand.u32 %v1485, 2147483648
  %v1739 = vor.u32 1.1754944e-38, %v1738
  %v1740 = vsel %vm1737, %v1739, %v1735
  %v1741 = vmul.f32 1.0, %v1740
  %v1742 = vrcp.pop %v1486
  %v1743 = vmul.f32 %v1486, %v1742
  %v1744 = vsub.f32 1.0, %v1743
  %v1745 = vmul.f32 %v1742, %v1744
  %v1746 = vadd.f32 %v1742, %v1745
  %vm1747 = vweird.f32 %v1486
  %vm1748 = vweird.f32 %v1742
  %vm1749 = vmor %vm1747, %vm1748
  %v1750 = vsel %vm1749, %v1742, %v1746
  %v1751 = vand.u32 2147483647, %v1486
  %vm1752 = vcmp.eq.f32.partialorder %v1751, 8.507059e+37
  %v1753 = vand.u32 %v1486, 2147483648
  %v1754 = vor.u32 1.1754944e-38, %v1753
  %v1755 = vsel %vm1752, %v1754, %v1750
  %v1756 = vmul.f32 1.0, %v1755
  %v1757 = vrcp.pop %v1487
  %v1758 = vmul.f32 %v1487, %v1757
  %v1759 = vsub.f32 1.0, %v1758
  %v1760 = vmul.f32 %v1757, %v1759
  %v1761 = vadd.f32 %v1757, %v1760
  %vm1762 = vweird.f32 %v1487
  %vm1763 = vweird.f32 %v1757
  %vm1764 = vmor %vm1762, %vm1763
  %v1765 = vsel %vm1764, %v1757, %v1761
  %v1766 = vand.u32 2147483647, %v1487
  %vm1767 = vcmp.eq.f32.partialorder %v1766, 8.507059e+37
  %v1768 = vand.u32 %v1487, 2147483648
  %v1769 = vor.u32 1.1754944e-38, %v1768
  %v1770 = vsel %vm1767, %v1769, %v1765
  %v1771 = vmul.f32 1.0, %v1770
  %v1772 = vrcp.pop %v1488
  %v1773 = vmul.f32 %v1488, %v1772
  %v1774 = vsub.f32 1.0, %v1773
  %v1775 = vmul.f32 %v1772, %v1774
  %v1776 = vadd.f32 %v1772, %v1775
  %vm1777 = vweird.f32 %v1488
  %vm1778 = vweird.f32 %v1772
  %vm1779 = vmor %vm1777, %vm1778
  %v1780 = vsel %vm1779, %v1772, %v1776
  %v1781 = vand.u32 2147483647, %v1488
  %vm1782 = vcmp.eq.f32.partialorder %v1781, 8.507059e+37
  %v1783 = vand.u32 %v1488, 2147483648
  %v1784 = vor.u32 1.1754944e-38, %v1783
  %v1785 = vsel %vm1782, %v1784, %v1780
  %v1786 = vmul.f32 1.0, %v1785
  %v1787 = vrcp.pop %v1489
  %v1788 = vmul.f32 %v1489, %v1787
  %v1789 = vsub.f32 1.0, %v1788
  %v1790 = vmul.f32 %v1787, %v1789
  %v1791 = vadd.f32 %v1787, %v1790
  %vm1792 = vweird.f32 %v1489
  %vm1793 = vweird.f32 %v1787
  %vm1794 = vmor %vm1792, %vm1793
  %v1795 = vsel %vm1794, %v1787, %v1791
  %v1796 = vand.u32 2147483647, %v1489
  %vm1797 = vcmp.eq.f32.partialorder %v1796, 8.507059e+37
  %v1798 = vand.u32 %v1489, 2147483648
  %v1799 = vor.u32 1.1754944e-38, %v1798
  %v1800 = vsel %vm1797, %v1799, %v1795
  %v1801 = vmul.f32 1.0, %v1800
  %v1802 = vrcp.pop %v1490
  %v1803 = vmul.f32 %v1490, %v1802
  %v1804 = vsub.f32 1.0, %v1803
  %v1805 = vmul.f32 %v1802, %v1804
  %v1806 = vadd.f32 %v1802, %v1805
  %vm1807 = vweird.f32 %v1490
  %vm1808 = vweird.f32 %v1802
  %vm1809 = vmor %vm1807, %vm1808
  %v1810 = vsel %vm1809, %v1802, %v1806
  %v1811 = vand.u32 2147483647, %v1490
  %vm1812 = vcmp.eq.f32.partialorder %v1811, 8.507059e+37
  %v1813 = vand.u32 %v1490, 2147483648
  %v1814 = vor.u32 1.1754944e-38, %v1813
  %v1815 = vsel %vm1812, %v1814, %v1810
  %v1816 = vmul.f32 1.0, %v1815
  %v1817 = vrcp.pop %v1491
  %v1818 = vmul.f32 %v1491, %v1817
  %v1819 = vsub.f32 1.0, %v1818
  %v1820 = vmul.f32 %v1817, %v1819
  %v1821 = vadd.f32 %v1817, %v1820
  %vm1822 = vweird.f32 %v1491
  %vm1823 = vweird.f32 %v1817
  %vm1824 = vmor %vm1822, %vm1823
  %v1825 = vsel %vm1824, %v1817, %v1821
  %v1826 = vand.u32 2147483647, %v1491
  %vm1827 = vcmp.eq.f32.partialorder %v1826, 8.507059e+37
  %v1828 = vand.u32 %v1491, 2147483648
  %v1829 = vor.u32 1.1754944e-38, %v1828
  %v1830 = vsel %vm1827, %v1829, %v1825
  %v1831 = vmul.f32 1.0, %v1830
  %v1832 = vrcp.pop %v1492
  %v1833 = vmul.f32 %v1492, %v1832
  %v1834 = vsub.f32 1.0, %v1833
  %v1835 = vmul.f32 %v1832, %v1834
  %v1836 = vadd.f32 %v1832, %v1835
  %vm1837 = vweird.f32 %v1492
  %vm1838 = vweird.f32 %v1832
  %vm1839 = vmor %vm1837, %vm1838
  %v1840 = vsel %vm1839, %v1832, %v1836
  %v1841 = vand.u32 2147483647, %v1492
  %vm1842 = vcmp.eq.f32.partialorder %v1841, 8.507059e+37
  %v1843 = vand.u32 %v1492, 2147483648
  %v1844 = vor.u32 1.1754944e-38, %v1843
  %v1845 = vsel %vm1842, %v1844, %v1840
  %v1846 = vmul.f32 1.0, %v1845
  %v1847 = vrcp.pop %v1493
  %v1848 = vmul.f32 %v1493, %v1847
  %v1849 = vsub.f32 1.0, %v1848
  %v1850 = vmul.f32 %v1847, %v1849
  %v1851 = vadd.f32 %v1847, %v1850
  %vm1852 = vweird.f32 %v1493
  %vm1853 = vweird.f32 %v1847
  %vm1854 = vmor %vm1852, %vm1853
  %v1855 = vsel %vm1854, %v1847, %v1851
  %v1856 = vand.u32 2147483647, %v1493
  %vm1857 = vcmp.eq.f32.partialorder %v1856, 8.507059e+37
  %v1858 = vand.u32 %v1493, 2147483648
  %v1859 = vor.u32 1.1754944e-38, %v1858
  %v1860 = vsel %vm1857, %v1859, %v1855
  %v1861 = vmul.f32 1.0, %v1860
  %v1862 = vrcp.pop %v1494
  %v1863 = vmul.f32 %v1494, %v1862
  %v1864 = vsub.f32 1.0, %v1863
  %v1865 = vmul.f32 %v1862, %v1864
  %v1866 = vadd.f32 %v1862, %v1865
  %vm1867 = vweird.f32 %v1494
  %vm1868 = vweird.f32 %v1862
  %vm1869 = vmor %vm1867, %vm1868
  %v1870 = vsel %vm1869, %v1862, %v1866
  %v1871 = vand.u32 2147483647, %v1494
  %vm1872 = vcmp.eq.f32.partialorder %v1871, 8.507059e+37
  %v1873 = vand.u32 %v1494, 2147483648
  %v1874 = vor.u32 1.1754944e-38, %v1873
  %v1875 = vsel %vm1872, %v1874, %v1870
  %v1876 = vmul.f32 1.0, %v1875
  %v1877 = vrcp.pop %v1495
  %v1878 = vmul.f32 %v1495, %v1877
  %v1879 = vsub.f32 1.0, %v1878
  %v1880 = vmul.f32 %v1877, %v1879
  %v1881 = vadd.f32 %v1877, %v1880
  %vm1882 = vweird.f32 %v1495
  %vm1883 = vweird.f32 %v1877
  %vm1884 = vmor %vm1882, %vm1883
  %v1885 = vsel %vm1884, %v1877, %v1881
  %v1886 = vand.u32 2147483647, %v1495
  %vm1887 = vcmp.eq.f32.partialorder %v1886, 8.507059e+37
  %v1888 = vand.u32 %v1495, 2147483648
  %v1889 = vor.u32 1.1754944e-38, %v1888
  %v1890 = vsel %vm1887, %v1889, %v1885
  %v1891 = vmul.f32 1.0, %v1890
  %v1892 = vrcp.pop %v1496
  %v1893 = vmul.f32 %v1496, %v1892
  %v1894 = vsub.f32 1.0, %v1893
  %v1895 = vmul.f32 %v1892, %v1894
  %v1896 = vadd.f32 %v1892, %v1895
  %vm1897 = vweird.f32 %v1496
  %vm1898 = vweird.f32 %v1892
  %vm1899 = vmor %vm1897, %vm1898
  %v1900 = vsel %vm1899, %v1892, %v1896
  %v1901 = vand.u32 2147483647, %v1496
  %vm1902 = vcmp.eq.f32.partialorder %v1901, 8.507059e+37
  %v1903 = vand.u32 %v1496, 2147483648
  %v1904 = vor.u32 1.1754944e-38, %v1903
  %v1905 = vsel %vm1902, %v1904, %v1900
  %v1906 = vmul.f32 1.0, %v1905
  %v1907 = vrcp.pop %v1497
  %v1908 = vmul.f32 %v1497, %v1907
  %v1909 = vsub.f32 1.0, %v1908
  %v1910 = vmul.f32 %v1907, %v1909
  %v1911 = vadd.f32 %v1907, %v1910
  %vm1912 = vweird.f32 %v1497
  %vm1913 = vweird.f32 %v1907
  %vm1914 = vmor %vm1912, %vm1913
  %v1915 = vsel %vm1914, %v1907, %v1911
  %v1916 = vand.u32 2147483647, %v1497
  %vm1917 = vcmp.eq.f32.partialorder %v1916, 8.507059e+37
  %v1918 = vand.u32 %v1497, 2147483648
  %v1919 = vor.u32 1.1754944e-38, %v1918
  %v1920 = vsel %vm1917, %v1919, %v1915
  %v1921 = vmul.f32 1.0, %v1920
  %v1922 = vrcp.pop %v1498
  %v1923 = vmul.f32 %v1498, %v1922
  %v1924 = vsub.f32 1.0, %v1923
  %v1925 = vmul.f32 %v1922, %v1924
  %v1926 = vadd.f32 %v1922, %v1925
  %vm1927 = vweird.f32 %v1498
  %vm1928 = vweird.f32 %v1922
  %vm1929 = vmor %vm1927, %vm1928
  %v1930 = vsel %vm1929, %v1922, %v1926
  %v1931 = vand.u32 2147483647, %v1498
  %vm1932 = vcmp.eq.f32.partialorder %v1931, 8.507059e+37
  %v1933 = vand.u32 %v1498, 2147483648
  %v1934 = vor.u32 1.1754944e-38, %v1933
  %v1935 = vsel %vm1932, %v1934, %v1930
  %v1936 = vmul.f32 1.0, %v1935
  %v1937 = vrcp.pop %v1499
  %v1938 = vmul.f32 %v1499, %v1937
  %v1939 = vsub.f32 1.0, %v1938
  %v1940 = vmul.f32 %v1937, %v1939
  %v1941 = vadd.f32 %v1937, %v1940
  %vm1942 = vweird.f32 %v1499
  %vm1943 = vweird.f32 %v1937
  %vm1944 = vmor %vm1942, %vm1943
  %v1945 = vsel %vm1944, %v1937, %v1941
  %v1946 = vand.u32 2147483647, %v1499
  %vm1947 = vcmp.eq.f32.partialorder %v1946, 8.507059e+37
  %v1948 = vand.u32 %v1499, 2147483648
  %v1949 = vor.u32 1.1754944e-38, %v1948
  %v1950 = vsel %vm1947, %v1949, %v1945
  %v1951 = vmul.f32 1.0, %v1950
  %v1952 = vrcp.pop %v1500
  %v1953 = vmul.f32 %v1500, %v1952
  %v1954 = vsub.f32 1.0, %v1953
  %v1955 = vmul.f32 %v1952, %v1954
  %v1956 = vadd.f32 %v1952, %v1955
  %vm1957 = vweird.f32 %v1500
  %vm1958 = vweird.f32 %v1952
  %vm1959 = vmor %vm1957, %vm1958
  %v1960 = vsel %vm1959, %v1952, %v1956
  %v1961 = vand.u32 2147483647, %v1500
  %vm1962 = vcmp.eq.f32.partialorder %v1961, 8.507059e+37
  %v1963 = vand.u32 %v1500, 2147483648
  %v1964 = vor.u32 1.1754944e-38, %v1963
  %v1965 = vsel %vm1962, %v1964, %v1960
  %v1966 = vmul.f32 1.0, %v1965
  %v1967 = vrcp.pop %v1501
  %v1968 = vmul.f32 %v1501, %v1967
  %v1969 = vsub.f32 1.0, %v1968
  %v1970 = vmul.f32 %v1967, %v1969
  %v1971 = vadd.f32 %v1967, %v1970
  %vm1972 = vweird.f32 %v1501
  %vm1973 = vweird.f32 %v1967
  %vm1974 = vmor %vm1972, %vm1973
  %v1975 = vsel %vm1974, %v1967, %v1971
  %v1976 = vand.u32 2147483647, %v1501
  %vm1977 = vcmp.eq.f32.partialorder %v1976, 8.507059e+37
  %v1978 = vand.u32 %v1501, 2147483648
  %v1979 = vor.u32 1.1754944e-38, %v1978
  %v1980 = vsel %vm1977, %v1979, %v1975
  %v1981 = vmul.f32 1.0, %v1980
  %vm1982 = vcmask 7168
  %1983 = vst.msk [vmem:[%s5] sm:$0xff] %vm1982, %v1516
  %1984 = vst.msk [vmem:[%s5 + $0x8] sm:$0xff] %vm1982, %v1531
  %1985 = vst.msk [vmem:[%s5 + $0x10] sm:$0xff] %vm1982, %v1546
  %1986 = vst.msk [vmem:[%s5 + $0x18] sm:$0xff] %vm1982, %v1561
  %1987 = vst.msk [vmem:[%s5 + $0x20] sm:$0xff] %vm1982, %v1576
  %1988 = vst.msk [vmem:[%s5 + $0x28] sm:$0xff] %vm1982, %v1591
  %1989 = vst.msk [vmem:[%s5 + $0x30] sm:$0xff] %vm1982, %v1606
  %1990 = vst.msk [vmem:[%s5 + $0x38] sm:$0xff] %vm1982, %v1621
  %1991 = vst.msk [vmem:[%s5 + $0x40] sm:$0xff] %vm1982, %v1636
  %1992 = vst.msk [vmem:[%s5 + $0x48] sm:$0xff] %vm1982, %v1651
  %1993 = vst.msk [vmem:[%s5 + $0x50] sm:$0xff] %vm1982, %v1666
  %1994 = vst.msk [vmem:[%s5 + $0x58] sm:$0xff] %vm1982, %v1681
  %1995 = vst.msk [vmem:[%s5 + $0x60] sm:$0xff] %vm1982, %v1696
  %1996 = vst.msk [vmem:[%s5 + $0x68] sm:$0xff] %vm1982, %v1711
  %1997 = vst.msk [vmem:[%s5 + $0x70] sm:$0xff] %vm1982, %v1726
  %1998 = vst.msk [vmem:[%s5 + $0x78] sm:$0xff] %vm1982, %v1741
  %1999 = vst.msk [vmem:[%s5 + $0x80] sm:$0xff] %vm1982, %v1756
  %2000 = vst.msk [vmem:[%s5 + $0x88] sm:$0xff] %vm1982, %v1771
  %2001 = vst.msk [vmem:[%s5 + $0x90] sm:$0xff] %vm1982, %v1786
  %2002 = vst.msk [vmem:[%s5 + $0x98] sm:$0xff] %vm1982, %v1801
  %2003 = vst.msk [vmem:[%s5 + $0xa0] sm:$0xff] %vm1982, %v1816
  %2004 = vst.msk [vmem:[%s5 + $0xa8] sm:$0xff] %vm1982, %v1831
  %2005 = vst.msk [vmem:[%s5 + $0xb0] sm:$0xff] %vm1982, %v1846
  %2006 = vst.msk [vmem:[%s5 + $0xb8] sm:$0xff] %vm1982, %v1861
  %2007 = vst.msk [vmem:[%s5 + $0xc0] sm:$0xff] %vm1982, %v1876
  %2008 = vst.msk [vmem:[%s5 + $0xc8] sm:$0xff] %vm1982, %v1891
  %2009 = vst.msk [vmem:[%s5 + $0xd0] sm:$0xff] %vm1982, %v1906
  %2010 = vst.msk [vmem:[%s5 + $0xd8] sm:$0xff] %vm1982, %v1921
  %2011 = vst.msk [vmem:[%s5 + $0xe0] sm:$0xff] %vm1982, %v1936
  %2012 = vst.msk [vmem:[%s5 + $0xe8] sm:$0xff] %vm1982, %v1951
  %2013 = vst.msk [vmem:[%s5 + $0xf0] sm:$0xff] %vm1982, %v1966
  %2014 = vst.msk [vmem:[%s5 + $0xf8] sm:$0xff] %vm1982, %v1981
  // Predicated region
  $region22: #{linear_prototype_fwd.1} parent=0 // pred_check
    _
  $region23: #{linear_prototype_fwd.1} parent=0 // pred_check_branch
    %2016 = sbr.rel (0) target = $region25
  $region24: #{linear_prototype_fwd.1} parent=0 // pred_region
    _
  $region25: #{linear_prototype_fwd.1} parent=0 // pred_fallthru
    _
  // Predicated region
  $region26: #{linear_prototype_fwd.1} parent=0 // pred_check
    _
  $region27: #{linear_prototype_fwd.1} parent=0 // pred_check_branch
    %2018 = sbr.rel (0) target = $region29
  $region28: #{linear_prototype_fwd.1} parent=0 // pred_region
    _
  $region29: #{linear_prototype_fwd.1} parent=0 // pred_fallthru
    _

</llo_original>
